<compile_context>
chip_gen: v6e
topology: v6e:2x2x1
jax: 0.10.0
libtpu: 0.0.40
codegen_flags: <defaults>
</compile_context>

<pallas_src>
import functools
import math

import jax
import jax.numpy as jnp
from jax import lax
from jax.experimental import pallas as pl
from jax.experimental.pallas import tpu as pltpu


_MASK_VALUE = -1e30  # finite sentinel: avoids NaN when a row is fully padded


# ---------------------------------------------------------------- kernel ----

def _mha_kernel(x_ref, wqkv_ref, bqkv_ref, wo_ref, bo_ref, bias_ref, pad_ref,
                out_ref, w_ref, qkv_scr, ctx_scr, *,
                heads_per_block, head_dim, num_heads):
    """One (batch, head_block) grid step:
         fused QKV projection for this head block -> per-head attention
         (static column slices of a VMEM slab, no stack/concat) ->
         accumulate out-projection and head-averaged weights into the
         (revisited) output blocks."""
    Hb, Dh, H = heads_per_block, head_dim, num_heads
    g = pl.program_id(1)

    # ---- init accumulators on the first head block (output blocks are
    #      revisited across g, so they act as resident accumulators).
    @pl.when(g == 0)
    def _init():
        out_ref[0] = jnp.broadcast_to(bo_ref[...], out_ref.shape[1:])  # + bo
        w_ref[0] = jnp.zeros(w_ref.shape[1:], jnp.float32)

    # ---- fused QKV projection for this head block: (T,E) @ (E, 3*Hb*Dh).
    # Weights arrive pre-cast to matmul_dtype; accumulate in f32; q-scaling is
    # already folded into the q columns of wqkv/bqkv by the wrapper.
    qkv = jnp.dot(x_ref[0], wqkv_ref[0],
                  preferred_element_type=jnp.float32) + bqkv_ref[0]
    qkv_scr[...] = qkv.astype(qkv_scr.dtype)          # (T, 3*Hb*Dh) slab

    pad_row = pad_ref[0]                              # (1, S) — 1.0 == padded
    inv_h = 1.0 / H
    k_off = Hb * Dh
    v_off = 2 * Hb * Dh

    # ---- per-head loop (Hb is small by construction; static slices on the
    #      scratch slab — no XLU relayouts, no materialized per-head copies).
    for h in range(Hb):
        c0 = h * Dh
        q_h = qkv_scr[:, c0:c0 + Dh]                  # (T, Dh)
        k_h = qkv_scr[:, k_off + c0:k_off + c0 + Dh]  # (S, Dh)
        v_h = qkv_scr[:, v_off + c0:v_off + c0 + Dh]  # (S, Dh)

        s = lax.dot_general(q_h, k_h, (((1,), (1,)), ((), ())),
                            preferred_element_type=jnp.float32)   # (T, S)
        s = s + bias_ref[0, h]
        s = jnp.where(pad_row > 0.5, _MASK_VALUE, s)

        m = jnp.max(s, axis=-1, keepdims=True)
        e = jnp.exp(s - m)
        p = e * pl.reciprocal(jnp.sum(e, axis=-1, keepdims=True), approx=True)

        # head-averaged attention weights (need_weights=True), f32 accumulate
        w_ref[0] += p * inv_h

        ctx = jnp.dot(p.astype(ctx_scr.dtype), v_h,
                      preferred_element_type=jnp.float32)          # (T, Dh)
        ctx_scr[:, c0:c0 + Dh] = ctx.astype(ctx_scr.dtype)

    # ---- partial out-projection for this head block, accumulated into the
    #      resident output block:  out += ctx_slab @ Wo[rows of this block].
    out_ref[0] += jnp.dot(ctx_scr[...], wo_ref[0],
                          preferred_element_type=jnp.float32)


# --------------------------------------------------------------- wrapper ----

def _pick_head_block(num_heads, tgt_len, src_len,
                     bias_block_budget=4 * 1024 * 1024):
    """Largest divisor of num_heads whose per-step f32 bias block fits budget."""
    for hb in range(num_heads, 0, -1):
        if num_heads % hb == 0 and hb * tgt_len * src_len * 4 <= bias_block_budget:
            return hb
    return 1


def multihead_attention(query, attn_bias, key_padding_mask, params, num_heads,
                        *, head_block=None, matmul_dtype=jnp.float32,
                        vmem_limit_bytes=32 * 1024 * 1024):
    T, B, E = query.shape
    H = num_heads
    assert E % H == 0
    Dh = E // H
    S = T
    scaling = Dh ** (-0.5)
    md = matmul_dtype

    if head_block is None:
        head_block = _pick_head_block(H, T, S)
    assert H % head_block == 0
    Hb = head_block
    G = H // Hb                       # head blocks (inner, "arbitrary" axis)
    HbDh = Hb * Dh

    # ---- one-time weight prep (trace-time, tiny): fold q-scaling, fuse Q|K|V
    #      per head block, pre-cast matmul operands to matmul_dtype.
    wq = params["wq"] * scaling
    bq = params["bq"] * scaling
    wk, wv = params["wk"], params["wv"]
    bk, bv = params["bk"], params["bv"]

    def cols(w, g):
        return w[:, g * HbDh:(g + 1) * HbDh]

    wqkv = jnp.stack(
        [jnp.concatenate([cols(wq, g), cols(wk, g), cols(wv, g)], axis=1)
         for g in range(G)], axis=0).astype(md)            # (G, E, 3*Hb*Dh)
    bqkv = jnp.stack(
        [jnp.concatenate([cols(bq, g), cols(bk, g), cols(bv, g)], axis=1)
         for g in range(G)], axis=0)                       # (G, 1, 3*Hb*Dh) f32
    wo_blocks = params["wo"].reshape(G, HbDh, E).astype(md)  # rows per block
    bo = params["bo"]                                      # (1, E) f32

    # ---- light XLA-side prep of activations / masks
    x_bte = query.transpose(1, 0, 2).astype(md)            # (B, T, E)
    bias = attn_bias.reshape(B, H, T, S)                   # f32 (free reshape)
    pad = key_padding_mask.reshape(B, 1, S).astype(jnp.float32)

    kernel = functools.partial(_mha_kernel, heads_per_block=Hb,
                               head_dim=Dh, num_heads=H)

    out_bte, w_mean = pl.pallas_call(
        kernel,
        grid=(B, G),
        out_shape=[jax.ShapeDtypeStruct((B, T, E), jnp.float32),
                   jax.ShapeDtypeStruct((B, T, S), jnp.float32)],
        in_specs=[
            pl.BlockSpec((1, T, E), lambda b, g: (b, 0, 0)),        # x (const over g)
            pl.BlockSpec((1, E, 3 * HbDh), lambda b, g: (g, 0, 0)),  # fused Wqkv block
            pl.BlockSpec((1, 1, 3 * HbDh), lambda b, g: (g, 0, 0)),  # fused bias block
            pl.BlockSpec((1, HbDh, E), lambda b, g: (g, 0, 0)),      # Wo rows block
            pl.BlockSpec((1, E), lambda b, g: (0, 0)),               # bo (resident)
            pl.BlockSpec((1, Hb, T, S), lambda b, g: (b, g, 0, 0)),  # attn_bias block
            pl.BlockSpec((1, 1, S), lambda b, g: (b, 0, 0)),         # key padding
        ],
        out_specs=[
            pl.BlockSpec((1, T, E), lambda b, g: (b, 0, 0)),         # out (accumulated)
            pl.BlockSpec((1, T, S), lambda b, g: (b, 0, 0)),         # mean weights
        ],
        scratch_shapes=[pltpu.VMEM((T, 3 * HbDh), md),   # fused qkv slab
                        pltpu.VMEM((T, HbDh), md)],      # per-block context slab
        compiler_params=pltpu.CompilerParams(
            dimension_semantics=("parallel", "arbitrary"),
            vmem_limit_bytes=vmem_limit_bytes),
    )(x_bte, wqkv, bqkv, wo_blocks, bo, bias, pad)

    attn = out_bte.transpose(1, 0, 2)                      # (T, B, E) f32
    return attn, w_mean                                    # (B, T, S)


# ------------------------------------------------------------ param setup ---

def init_params(key, E):
    """Deterministic synthetic init mirroring reset_parameters() shapes.
    Weights are stored pre-transposed as (in_features, out_features)."""
    keys = jax.random.split(key, 7)

    def xavier(k, gain):
        bound = gain * math.sqrt(6.0 / (E + E))
        return jax.random.uniform(k, (E, E), jnp.float32, -bound, bound)

    g = 1.0 / math.sqrt(2.0)          # q/k/v gain (qkv_same_dim)
    bb = 1.0 / math.sqrt(E)           # default nn.Linear bias bound
    return dict(
        wq=xavier(keys[0], g), wk=xavier(keys[1], g), wv=xavier(keys[2], g),
        wo=xavier(keys[3], 1.0),
        bq=jax.random.uniform(keys[4], (1, E), jnp.float32, -bb, bb),
        bk=jax.random.uniform(keys[5], (1, E), jnp.float32, -bb, bb),
        bv=jax.random.uniform(keys[6], (1, E), jnp.float32, -bb, bb),
        bo=jnp.zeros((1, E), jnp.float32),   # out_proj.bias initialized to 0
    )


# ---------------------------------------------------------- jnp reference ---

def reference(query, attn_bias, key_padding_mask, params, H):
    T, B, E = query.shape
    Dh = E // H
    x = query.reshape(T * B, E)
    q = (x @ params["wq"] + params["bq"]) * (Dh ** -0.5)
    k = x @ params["wk"] + params["bk"]
    v = x @ params["wv"] + params["bv"]
    qh = q.reshape(T, B * H, Dh).transpose(1, 0, 2)
    kh = k.reshape(T, B * H, Dh).transpose(1, 0, 2)
    vh = v.reshape(T, B * H, Dh).transpose(1, 0, 2)
    s = jnp.einsum("btd,bsd->bts", qh, kh) + attn_bias
    pad = key_padding_mask.reshape(B, 1, 1, T).astype(bool)
    s = jnp.where(pad, -jnp.inf, s.reshape(B, H, T, T)).reshape(B * H, T, T)
    p = jax.nn.softmax(s, axis=-1)
    a = jnp.einsum("bts,bsd->btd", p, vh)
    a = a.transpose(1, 0, 2).reshape(T * B, E)
    out = (a @ params["wo"] + params["bo"]).reshape(T, B, E)
    w = p.reshape(B, H, T, T).mean(axis=1)
    return out, w


# ------------------------------------------------------------------- main ---

if __name__ == "__main__":
    T, B, E, H = 8, 2, 32, 4          # tgt_len, batch, embed_dim, num_heads
    key = jax.random.PRNGKey(0)
    kq, kb, kp = jax.random.split(key, 3)

    query = jax.random.normal(kq, (T, B, E), jnp.float32)
    attn_bias = 0.1 * jax.random.normal(kb, (B * H, T, T), jnp.float32)
    key_padding_mask = jnp.zeros((B, T), jnp.float32).at[1, T - 1].set(1.0)
    params = init_params(kp, E)

    ref_attn, ref_w = reference(query, attn_bias, key_padding_mask, params, H)

    # f32 path, head-tiled (head_block=2 -> 2 head blocks) to exercise the
    # cross-head-block accumulation of the out-projection / mean weights.
    attn, attn_w = multihead_attention(query, attn_bias, key_padding_mask,
                                       params, H, head_block=2)
    jax.block_until_ready((attn, attn_w))
    assert attn.shape == (T, B, E) and attn_w.shape == (B, T, T)
    assert jnp.allclose(attn, ref_attn, atol=2e-3, rtol=2e-3)
    assert jnp.allclose(attn_w, ref_w, atol=2e-3, rtol=2e-3)

    # f32 path, single head block (resident fused weights, G=1)
    attn1, attn_w1 = multihead_attention(query, attn_bias, key_padding_mask,
                                         params, H)
    jax.block_until_ready((attn1, attn_w1))
    assert jnp.allclose(attn1, ref_attn, atol=2e-3, rtol=2e-3)
    assert jnp.allclose(attn_w1, ref_w, atol=2e-3, rtol=2e-3)

    # bf16 matmul-operand path (v6e/v7x MXU fast path; f32 accum + f32 softmax)
    attn_bf, w_bf = multihead_attention(query, attn_bias, key_padding_mask,
                                        params, H, head_block=2,
                                        matmul_dtype=jnp.bfloat16)
    jax.block_until_ready((attn_bf, w_bf))
    assert bool(jnp.all(jnp.isfinite(attn_bf))) and bool(jnp.all(jnp.isfinite(w_bf)))
    assert jnp.allclose(attn_bf, ref_attn, atol=1.5e-1, rtol=1.5e-1)
    assert jnp.allclose(w_bf, ref_w, atol=5e-2, rtol=5e-2)

    # TODO(synk): dropout_module (p=0.0), lrp / before_softmax /
    # need_head_weights branches are identity / unused in this forward config.
    print("KERNEL_OK")
</pallas_src>

<mosaic_0001>
module attributes {stable_mosaic.version = 11 : i64} {
  func.func @_mha_kernel(%arg0: i32, %arg1: i32, %arg2: memref<1x8x32xf32, #tpu.memory_space<vmem>>, %arg3: memref<1x32x48xf32, #tpu.memory_space<vmem>>, %arg4: memref<1x1x48xf32, #tpu.memory_space<vmem>>, %arg5: memref<1x16x32xf32, #tpu.memory_space<vmem>>, %arg6: memref<1x32xf32, #tpu.memory_space<vmem>>, %arg7: memref<1x2x8x8xf32, #tpu.memory_space<vmem>>, %arg8: memref<1x1x8xf32, #tpu.memory_space<vmem>>, %arg9: memref<1x8x32xf32, #tpu.memory_space<vmem>>, %arg10: memref<1x8x8xf32, #tpu.memory_space<vmem>>, %arg11: memref<8x48xf32, #tpu.memory_space<vmem>>, %arg12: memref<8x16xf32, #tpu.memory_space<vmem>>) attributes {dimension_semantics = [#tpu.dimension_semantics<parallel>, #tpu.dimension_semantics<arbitrary>], iteration_bounds = array<i64: 2, 2>, scalar_prefetch = 0 : i64, scratch_operands = 2 : i64, tpu.core_type = #tpu.core_type<tc>, window_params = [{transform_indices = @transform_0, window_bounds = array<i64: 1, 8, 32>}, {transform_indices = @transform_1, window_bounds = array<i64: 1, 32, 48>}, {transform_indices = @transform_2, window_bounds = array<i64: 1, 1, 48>}, {transform_indices = @transform_3, window_bounds = array<i64: 1, 16, 32>}, {pipeline_mode = #tpu.pipeline_mode<synchronous>, transform_indices = @transform_4, window_bounds = array<i64: 1, 32>}, {transform_indices = @transform_5, window_bounds = array<i64: 1, 2, 8, 8>}, {transform_indices = @transform_6, window_bounds = array<i64: 1, 1, 8>}, {transform_indices = @transform_7, window_bounds = array<i64: 1, 8, 32>}, {transform_indices = @transform_8, window_bounds = array<i64: 1, 8, 8>}]} {
    %c0_i32 = arith.constant 0 : i32
    %0 = arith.cmpi eq, %arg1, %c0_i32 : i32
    %1 = arith.extui %0 : i1 to i32
    %c0_i32_0 = arith.constant 0 : i32
    %2 = arith.cmpi ne, %1, %c0_i32_0 : i32
    scf.if %2 {
      %c0_70 = arith.constant 0 : index
      %c0_71 = arith.constant 0 : index
      %91 = vector.load %arg6[%c0_70, %c0_71] : memref<1x32xf32, #tpu.memory_space<vmem>>, vector<1x32xf32>
      %92 = vector.shape_cast %91 : vector<1x32xf32> to vector<1x32xf32>
      %93 = vector.broadcast %92 : vector<1x32xf32> to vector<8x32xf32>
      %c0_72 = arith.constant 0 : index
      %c0_73 = arith.constant 0 : index
      %c0_74 = arith.constant 0 : index
      %94 = vector.load %arg9[%c0_72, %c0_73, %c0_74] : memref<1x8x32xf32, #tpu.memory_space<vmem>>, vector<1x8x32xf32>
      %95 = vector.shape_cast %94 : vector<1x8x32xf32> to vector<8x32xf32>
      %96 = vector.shape_cast %93 : vector<8x32xf32> to vector<1x8x32xf32>
      tpu.vector_store %arg9[%c0_72, %c0_73, %c0_74], %96 {strides = array<i32>} : memref<1x8x32xf32, #tpu.memory_space<vmem>>, vector<1x8x32xf32>,
      %cst_75 = arith.constant 0.000000e+00 : f32
      %97 = vector.broadcast %cst_75 : f32 to vector<8x8xf32>
      %c0_76 = arith.constant 0 : index
      %c0_77 = arith.constant 0 : index
      %c0_78 = arith.constant 0 : index
      %98 = vector.load %arg10[%c0_76, %c0_77, %c0_78] : memref<1x8x8xf32, #tpu.memory_space<vmem>>, vector<1x8x8xf32>
      %99 = vector.shape_cast %98 : vector<1x8x8xf32> to vector<8x8xf32>
      %100 = vector.shape_cast %97 : vector<8x8xf32> to vector<1x8x8xf32>
      tpu.vector_store %arg10[%c0_76, %c0_77, %c0_78], %100 {strides = array<i32>} : memref<1x8x8xf32, #tpu.memory_space<vmem>>, vector<1x8x8xf32>,
    } else {
    }
    %c0 = arith.constant 0 : index
    %c0_1 = arith.constant 0 : index
    %c0_2 = arith.constant 0 : index
    %3 = vector.load %arg2[%c0, %c0_1, %c0_2] : memref<1x8x32xf32, #tpu.memory_space<vmem>>, vector<1x8x32xf32>
    %4 = vector.shape_cast %3 : vector<1x8x32xf32> to vector<8x32xf32>
    %c0_3 = arith.constant 0 : index
    %c0_4 = arith.constant 0 : index
    %c0_5 = arith.constant 0 : index
    %5 = vector.load %arg3[%c0_3, %c0_4, %c0_5] : memref<1x32x48xf32, #tpu.memory_space<vmem>>, vector<1x32x48xf32>
    %6 = vector.shape_cast %5 : vector<1x32x48xf32> to vector<32x48xf32>
    %cst = arith.constant dense<0.000000e+00> : vector<8x48xf32>
    %7 = tpu.matmul %4, %6, %cst {dimension_numbers = #tpu.dot_dimension_numbers<[1], [0], [0], [1], [0, 0, 1, 1], [], []>} : vector<8x32xf32>, vector<32x48xf32>, vector<8x48xf32> -> vector<8x48xf32>
    %c0_6 = arith.constant 0 : index
    %c0_7 = arith.constant 0 : index
    %c0_8 = arith.constant 0 : index
    %8 = vector.load %arg4[%c0_6, %c0_7, %c0_8] : memref<1x1x48xf32, #tpu.memory_space<vmem>>, vector<1x1x48xf32>
    %9 = vector.shape_cast %8 : vector<1x1x48xf32> to vector<1x48xf32>
    %10 = vector.broadcast %9 : vector<1x48xf32> to vector<8x48xf32>
    %11 = arith.addf %7, %10 : vector<8x48xf32>
    %c0_9 = arith.constant 0 : index
    %c0_10 = arith.constant 0 : index
    %12 = vector.load %arg11[%c0_9, %c0_10] : memref<8x48xf32, #tpu.memory_space<vmem>>, vector<8x48xf32>
    tpu.vector_store %arg11[%c0_9, %c0_10], %11 {strides = array<i32>} : memref<8x48xf32, #tpu.memory_space<vmem>>, vector<8x48xf32>,
    %c0_11 = arith.constant 0 : index
    %c0_12 = arith.constant 0 : index
    %c0_13 = arith.constant 0 : index
    %13 = vector.load %arg8[%c0_11, %c0_12, %c0_13] : memref<1x1x8xf32, #tpu.memory_space<vmem>>, vector<1x1x8xf32>
    %14 = vector.shape_cast %13 : vector<1x1x8xf32> to vector<1x8xf32>
    %c0_14 = arith.constant 0 : index
    %c0_15 = arith.constant 0 : index
    %15 = vector.load %arg11[%c0_14, %c0_15] : memref<8x48xf32, #tpu.memory_space<vmem>>, vector<8x8xf32>
    %c0_16 = arith.constant 0 : index
    %c16 = arith.constant 16 : index
    %16 = vector.load %arg11[%c0_16, %c16] : memref<8x48xf32, #tpu.memory_space<vmem>>, vector<8x8xf32>
    %c0_17 = arith.constant 0 : index
    %c32 = arith.constant 32 : index
    %17 = vector.load %arg11[%c0_17, %c32] : memref<8x48xf32, #tpu.memory_space<vmem>>, vector<8x8xf32>
    %cst_18 = arith.constant dense<0.000000e+00> : vector<8x8xf32>
    %18 = tpu.matmul %15, %16, %cst_18 {dimension_numbers = #tpu.dot_dimension_numbers<[1], [1], [0], [0], [0, 0, 1, 0], [], []>} : vector<8x8xf32>, vector<8x8xf32>, vector<8x8xf32> -> vector<8x8xf32>
    %c0_19 = arith.constant 0 : index
    %c0_20 = arith.constant 0 : index
    %c0_21 = arith.constant 0 : index
    %c0_22 = arith.constant 0 : index
    %19 = vector.load %arg7[%c0_19, %c0_20, %c0_21, %c0_22] : memref<1x2x8x8xf32, #tpu.memory_space<vmem>>, vector<1x1x8x8xf32>
    %20 = vector.shape_cast %19 : vector<1x1x8x8xf32> to vector<8x8xf32>
    %21 = arith.addf %18, %20 : vector<8x8xf32>
    %cst_23 = arith.constant 5.000000e-01 : f32
    %22 = vector.broadcast %cst_23 : f32 to vector<1x8xf32>
    %23 = arith.cmpf ogt, %14, %22 : vector<1x8xf32>
    %cst_24 = arith.constant -1.000000e+30 : f32
    %24 = vector.shape_cast %23 : vector<1x8xi1> to vector<1x8xi1>
    %25 = vector.broadcast %24 : vector<1x8xi1> to vector<8x8xi1>
    %26 = vector.broadcast %cst_24 : f32 to vector<8x8xf32>
    %27 = arith.select %25, %26, %21 : vector<8x8xi1>, vector<8x8xf32>
    %cst_25 = arith.constant dense<0xFF800000> : vector<8xf32>
    %28 = vector.multi_reduction <maximumf>, %27, %cst_25 [1] : vector<8x8xf32> to vector<8xf32>
    %29 = vector.shape_cast %28 : vector<8xf32> to vector<8x1xf32>
    %30 = vector.broadcast %29 : vector<8x1xf32> to vector<8x8xf32>
    %31 = arith.subf %27, %30 : vector<8x8xf32>
    %32 = math.exp %31 : vector<8x8xf32>
    %cst_26 = arith.constant dense<0.000000e+00> : vector<8xf32>
    %33 = vector.multi_reduction <add>, %32, %cst_26 [1] : vector<8x8xf32> to vector<8xf32>
    %34 = vector.shape_cast %33 : vector<8xf32> to vector<8x1xf32>
    %35 = tpu.reciprocal %34 {approx = true} : vector<8x1xf32> -> vector<8x1xf32>
    %36 = vector.broadcast %35 : vector<8x1xf32> to vector<8x8xf32>
    %37 = arith.mulf %32, %36 : vector<8x8xf32>
    %c0_27 = arith.constant 0 : index
    %c0_28 = arith.constant 0 : index
    %c0_29 = arith.constant 0 : index
    %38 = vector.load %arg10[%c0_27, %c0_28, %c0_29] : memref<1x8x8xf32, #tpu.memory_space<vmem>>, vector<1x8x8xf32>
    %39 = vector.shape_cast %38 : vector<1x8x8xf32> to vector<8x8xf32>
    %cst_30 = arith.constant 2.500000e-01 : f32
    %40 = vector.broadcast %cst_30 : f32 to vector<8x8xf32>
    %41 = arith.mulf %37, %40 : vector<8x8xf32>
    %42 = arith.addf %39, %41 : vector<8x8xf32>
    %c0_31 = arith.constant 0 : index
    %c0_32 = arith.constant 0 : index
    %c0_33 = arith.constant 0 : index
    %43 = vector.load %arg10[%c0_31, %c0_32, %c0_33] : memref<1x8x8xf32, #tpu.memory_space<vmem>>, vector<1x8x8xf32>
    %44 = vector.shape_cast %43 : vector<1x8x8xf32> to vector<8x8xf32>
    %45 = vector.shape_cast %42 : vector<8x8xf32> to vector<1x8x8xf32>
    tpu.vector_store %arg10[%c0_31, %c0_32, %c0_33], %45 {strides = array<i32>} : memref<1x8x8xf32, #tpu.memory_space<vmem>>, vector<1x8x8xf32>,
    %cst_34 = arith.constant dense<0.000000e+00> : vector<8x8xf32>
    %46 = tpu.matmul %37, %17, %cst_34 {dimension_numbers = #tpu.dot_dimension_numbers<[1], [0], [0], [1], [0, 0, 1, 1], [], []>} : vector<8x8xf32>, vector<8x8xf32>, vector<8x8xf32> -> vector<8x8xf32>
    %c0_35 = arith.constant 0 : index
    %c0_36 = arith.constant 0 : index
    %47 = vector.load %arg12[%c0_35, %c0_36] : memref<8x16xf32, #tpu.memory_space<vmem>>, vector<8x8xf32>
    tpu.vector_store %arg12[%c0_35, %c0_36], %46 {strides = array<i32>} : memref<8x16xf32, #tpu.memory_space<vmem>>, vector<8x8xf32>,
    %c0_37 = arith.constant 0 : index
    %c8 = arith.constant 8 : index
    %48 = vector.load %arg11[%c0_37, %c8] : memref<8x48xf32, #tpu.memory_space<vmem>>, vector<8x8xf32>
    %c0_38 = arith.constant 0 : index
    %c24 = arith.constant 24 : index
    %49 = vector.load %arg11[%c0_38, %c24] : memref<8x48xf32, #tpu.memory_space<vmem>>, vector<8x8xf32>
    %c0_39 = arith.constant 0 : index
    %c40 = arith.constant 40 : index
    %50 = vector.load %arg11[%c0_39, %c40] : memref<8x48xf32, #tpu.memory_space<vmem>>, vector<8x8xf32>
    %cst_40 = arith.constant dense<0.000000e+00> : vector<8x8xf32>
    %51 = tpu.matmul %48, %49, %cst_40 {dimension_numbers = #tpu.dot_dimension_numbers<[1], [1], [0], [0], [0, 0, 1, 0], [], []>} : vector<8x8xf32>, vector<8x8xf32>, vector<8x8xf32> -> vector<8x8xf32>
    %c0_41 = arith.constant 0 : index
    %c1 = arith.constant 1 : index
    %c0_42 = arith.constant 0 : index
    %c0_43 = arith.constant 0 : index
    %52 = vector.load %arg7[%c0_41, %c1, %c0_42, %c0_43] : memref<1x2x8x8xf32, #tpu.memory_space<vmem>>, vector<1x1x8x8xf32>
    %53 = vector.shape_cast %52 : vector<1x1x8x8xf32> to vector<8x8xf32>
    %54 = arith.addf %51, %53 : vector<8x8xf32>
    %cst_44 = arith.constant 5.000000e-01 : f32
    %55 = vector.broadcast %cst_44 : f32 to vector<1x8xf32>
    %56 = arith.cmpf ogt, %14, %55 : vector<1x8xf32>
    %cst_45 = arith.constant -1.000000e+30 : f32
    %57 = vector.shape_cast %56 : vector<1x8xi1> to vector<1x8xi1>
    %58 = vector.broadcast %57 : vector<1x8xi1> to vector<8x8xi1>
    %59 = vector.broadcast %cst_45 : f32 to vector<8x8xf32>
    %60 = arith.select %58, %59, %54 : vector<8x8xi1>, vector<8x8xf32>
    %cst_46 = arith.constant dense<0xFF800000> : vector<8xf32>
    %61 = vector.multi_reduction <maximumf>, %60, %cst_46 [1] : vector<8x8xf32> to vector<8xf32>
    %62 = vector.shape_cast %61 : vector<8xf32> to vector<8x1xf32>
    %63 = vector.broadcast %62 : vector<8x1xf32> to vector<8x8xf32>
    %64 = arith.subf %60, %63 : vector<8x8xf32>
    %65 = math.exp %64 : vector<8x8xf32>
    %cst_47 = arith.constant dense<0.000000e+00> : vector<8xf32>
    %66 = vector.multi_reduction <add>, %65, %cst_47 [1] : vector<8x8xf32> to vector<8xf32>
    %67 = vector.shape_cast %66 : vector<8xf32> to vector<8x1xf32>
    %68 = tpu.reciprocal %67 {approx = true} : vector<8x1xf32> -> vector<8x1xf32>
    %69 = vector.broadcast %68 : vector<8x1xf32> to vector<8x8xf32>
    %70 = arith.mulf %65, %69 : vector<8x8xf32>
    %c0_48 = arith.constant 0 : index
    %c0_49 = arith.constant 0 : index
    %c0_50 = arith.constant 0 : index
    %71 = vector.load %arg10[%c0_48, %c0_49, %c0_50] : memref<1x8x8xf32, #tpu.memory_space<vmem>>, vector<1x8x8xf32>
    %72 = vector.shape_cast %71 : vector<1x8x8xf32> to vector<8x8xf32>
    %cst_51 = arith.constant 2.500000e-01 : f32
    %73 = vector.broadcast %cst_51 : f32 to vector<8x8xf32>
    %74 = arith.mulf %70, %73 : vector<8x8xf32>
    %75 = arith.addf %72, %74 : vector<8x8xf32>
    %c0_52 = arith.constant 0 : index
    %c0_53 = arith.constant 0 : index
    %c0_54 = arith.constant 0 : index
    %76 = vector.load %arg10[%c0_52, %c0_53, %c0_54] : memref<1x8x8xf32, #tpu.memory_space<vmem>>, vector<1x8x8xf32>
    %77 = vector.shape_cast %76 : vector<1x8x8xf32> to vector<8x8xf32>
    %78 = vector.shape_cast %75 : vector<8x8xf32> to vector<1x8x8xf32>
    tpu.vector_store %arg10[%c0_52, %c0_53, %c0_54], %78 {strides = array<i32>} : memref<1x8x8xf32, #tpu.memory_space<vmem>>, vector<1x8x8xf32>,
    %cst_55 = arith.constant dense<0.000000e+00> : vector<8x8xf32>
    %79 = tpu.matmul %70, %50, %cst_55 {dimension_numbers = #tpu.dot_dimension_numbers<[1], [0], [0], [1], [0, 0, 1, 1], [], []>} : vector<8x8xf32>, vector<8x8xf32>, vector<8x8xf32> -> vector<8x8xf32>
    %c0_56 = arith.constant 0 : index
    %c8_57 = arith.constant 8 : index
    %80 = vector.load %arg12[%c0_56, %c8_57] : memref<8x16xf32, #tpu.memory_space<vmem>>, vector<8x8xf32>
    tpu.vector_store %arg12[%c0_56, %c8_57], %79 {strides = array<i32>} : memref<8x16xf32, #tpu.memory_space<vmem>>, vector<8x8xf32>,
    %c0_58 = arith.constant 0 : index
    %c0_59 = arith.constant 0 : index
    %c0_60 = arith.constant 0 : index
    %81 = vector.load %arg9[%c0_58, %c0_59, %c0_60] : memref<1x8x32xf32, #tpu.memory_space<vmem>>, vector<1x8x32xf32>
    %82 = vector.shape_cast %81 : vector<1x8x32xf32> to vector<8x32xf32>
    %c0_61 = arith.constant 0 : index
    %c0_62 = arith.constant 0 : index
    %83 = vector.load %arg12[%c0_61, %c0_62] : memref<8x16xf32, #tpu.memory_space<vmem>>, vector<8x16xf32>
    %c0_63 = arith.constant 0 : index
    %c0_64 = arith.constant 0 : index
    %c0_65 = arith.constant 0 : index
    %84 = vector.load %arg5[%c0_63, %c0_64, %c0_65] : memref<1x16x32xf32, #tpu.memory_space<vmem>>, vector<1x16x32xf32>
    %85 = vector.shape_cast %84 : vector<1x16x32xf32> to vector<16x32xf32>
    %cst_66 = arith.constant dense<0.000000e+00> : vector<8x32xf32>
    %86 = tpu.matmul %83, %85, %cst_66 {dimension_numbers = #tpu.dot_dimension_numbers<[1], [0], [0], [1], [0, 0, 1, 1], [], []>} : vector<8x16xf32>, vector<16x32xf32>, vector<8x32xf32> -> vector<8x32xf32>
    %87 = arith.addf %82, %86 : vector<8x32xf32>
    %c0_67 = arith.constant 0 : index
    %c0_68 = arith.constant 0 : index
    %c0_69 = arith.constant 0 : index
    %88 = vector.load %arg9[%c0_67, %c0_68, %c0_69] : memref<1x8x32xf32, #tpu.memory_space<vmem>>, vector<1x8x32xf32>
    %89 = vector.shape_cast %88 : vector<1x8x32xf32> to vector<8x32xf32>
    %90 = vector.shape_cast %87 : vector<8x32xf32> to vector<1x8x32xf32>
    tpu.vector_store %arg9[%c0_67, %c0_68, %c0_69], %90 {strides = array<i32>} : memref<1x8x32xf32, #tpu.memory_space<vmem>>, vector<1x8x32xf32>,
    return
  }
  func.func @transform_0(%arg0: i32, %arg1: i32) -> (i32, i32, i32) {
    %c0_i32 = arith.constant 0 : i32
    %c0_i32_0 = arith.constant 0 : i32
    %c0_i32_1 = arith.constant 0 : i32
    return %arg0, %c0_i32, %c0_i32_0 : i32, i32, i32
  }
  func.func @transform_1(%arg0: i32, %arg1: i32) -> (i32, i32, i32) {
    %c0_i32 = arith.constant 0 : i32
    %c0_i32_0 = arith.constant 0 : i32
    %c0_i32_1 = arith.constant 0 : i32
    return %arg1, %c0_i32, %c0_i32_0 : i32, i32, i32
  }
  func.func @transform_2(%arg0: i32, %arg1: i32) -> (i32, i32, i32) {
    %c0_i32 = arith.constant 0 : i32
    %c0_i32_0 = arith.constant 0 : i32
    %c0_i32_1 = arith.constant 0 : i32
    return %arg1, %c0_i32, %c0_i32_0 : i32, i32, i32
  }
  func.func @transform_3(%arg0: i32, %arg1: i32) -> (i32, i32, i32) {
    %c0_i32 = arith.constant 0 : i32
    %c0_i32_0 = arith.constant 0 : i32
    %c0_i32_1 = arith.constant 0 : i32
    return %arg1, %c0_i32, %c0_i32_0 : i32, i32, i32
  }
  func.func @transform_4(%arg0: i32, %arg1: i32) -> (i32, i32) {
    %c0_i32 = arith.constant 0 : i32
    %c0_i32_0 = arith.constant 0 : i32
    %c0_i32_1 = arith.constant 0 : i32
    return %c0_i32, %c0_i32_0 : i32, i32
  }
  func.func @transform_5(%arg0: i32, %arg1: i32) -> (i32, i32, i32, i32) {
    %c0_i32 = arith.constant 0 : i32
    %c0_i32_0 = arith.constant 0 : i32
    %c0_i32_1 = arith.constant 0 : i32
    return %arg0, %arg1, %c0_i32, %c0_i32_0 : i32, i32, i32, i32
  }
  func.func @transform_6(%arg0: i32, %arg1: i32) -> (i32, i32, i32) {
    %c0_i32 = arith.constant 0 : i32
    %c0_i32_0 = arith.constant 0 : i32
    %c0_i32_1 = arith.constant 0 : i32
    return %arg0, %c0_i32, %c0_i32_0 : i32, i32, i32
  }
  func.func @transform_7(%arg0: i32, %arg1: i32) -> (i32, i32, i32) {
    %c0_i32 = arith.constant 0 : i32
    %c0_i32_0 = arith.constant 0 : i32
    %c0_i32_1 = arith.constant 0 : i32
    return %arg0, %c0_i32, %c0_i32_0 : i32, i32, i32
  }
  func.func @transform_8(%arg0: i32, %arg1: i32) -> (i32, i32, i32) {
    %c0_i32 = arith.constant 0 : i32
    %c0_i32_0 = arith.constant 0 : i32
    %c0_i32_1 = arith.constant 0 : i32
    return %arg0, %c0_i32, %c0_i32_0 : i32, i32, i32
  }
}

</mosaic_0001>

<llo_original>
// kernel: tpu_custom_call.1
$region0: #{tpu_custom_call.1}
  #allocation0 [shape = 'u32[]', space=smem, size = 0x4, offset = 0x4, fixed_abs, tag = 'smem constant byte address 0x4 - core index']
  #allocation1 [shape = 'u32[144,128]{1,0:T(1,128)}', space=vmem, size = 0x12000, scoped, tag = 'internal scratch']
  #allocation2 [shape = 'f32[8,48]{1,0:T(8,128)}', space=vmem, size = 0x1000, scoped, tag = 'scratch operand']
  #allocation3 [shape = 'f32[8,16]{1,0:T(8,128)}', space=vmem, size = 0x1000, scoped, tag = 'scratch operand']
  %s0 = inlined_call_operand.hbm [shape: f32[2,8,32], index: 0, kind: input, shape index: {}]
  %s1 = inlined_call_operand.hbm [shape: f32[2,32,48], index: 1, kind: input, shape index: {}]
  %s2 = inlined_call_operand.vmem [shape: f32[2,1,48], index: 2, kind: input, shape index: {}]
  %s3 = inlined_call_operand.hbm [shape: f32[2,16,32], index: 3, kind: input, shape index: {}]
  %s4 = inlined_call_operand.vmem [shape: f32[1,32], index: 4, kind: input, shape index: {}]
  %s5 = inlined_call_operand.hbm [shape: f32[2,4,8,8], index: 5, kind: input, shape index: {}]
  %s6 = inlined_call_operand.vmem [shape: f32[2,1,8], index: 6, kind: input, shape index: {}]
  %s7 = inlined_call_operand.hbm [shape: f32[2,8,32], index: 7, kind: output, shape index: {0}]
  %s8 = inlined_call_operand.hbm [shape: f32[2,8,8], index: 8, kind: output, shape index: {1}]
  %9 = xla_tuple %s7, %s8
  %s10 = sld [smem:[#allocation0]]
  $region89: #{tpu_custom_call.1} parent=0
    _
  %s12 = ssub.s32 1, %s10
  %s13 = scalar_select 0, %s12, %s10
  $region1: #{tpu_custom_call.1} parent=0
    #allocation4 [shape = 'u8[8192]{0}', space=vmem, size = 0x2000, scoped, tag = 'input window, operand 0']
    #allocation5 [shape = 's32[2]{0}', space=sflag, size = 0x8, scoped, tag = 'scoped memory for tpu_custom_call.1']
    #allocation6 [shape = 's32[2]{0}', space=sflag, size = 0x8, scoped, tag = 'scoped memory for tpu_custom_call.1']
    #allocation7 [shape = 'u8[32768]{0}', space=vmem, size = 0x8000, scoped, tag = 'input window, operand 1']
    #allocation8 [shape = 's32[2]{0}', space=sflag, size = 0x8, scoped, tag = 'scoped memory for tpu_custom_call.1']
    #allocation9 [shape = 'u8[16384]{0}', space=vmem, size = 0x4000, scoped, tag = 'input window, operand 3']
    #allocation10 [shape = 'u8[16384]{0}', space=vmem, size = 0x4000, scoped, tag = 'input window, operand 5']
    #allocation11 [shape = 's32[2]{0}', space=sflag, size = 0x8, scoped, tag = 'scoped memory for tpu_custom_call.1']
    #allocation12 [shape = 'u8[8192]{0}', space=vmem, size = 0x2000, scoped, tag = 'output window, operand 0']
    #allocation13 [shape = 'u8[8192]{0}', space=vmem, size = 0x2000, scoped, tag = 'output window, operand 1']
    #allocation14 [shape = 's32[2]{0}', space=sflag, size = 0x8, scoped, tag = 'scoped memory for tpu_custom_call.1']
    %14 = vsyncpa [#allocation5], 0
    %s15 = scalar_lea.sflag [#allocation5], 1
    %16 = vsyncpa %s15, 0
    %17 = vsyncpa [#allocation8], 0
    %s18 = scalar_lea.sflag [#allocation8], 1
    %19 = vsyncpa %s18, 0
    %20 = vsyncpa [#allocation11], 0
    %s21 = scalar_lea.sflag [#allocation11], 1
    %22 = vsyncpa %s21, 0
    %23 = vsyncpa [#allocation6], 0
    %s24 = scalar_lea.sflag [#allocation6], 1
    %25 = vsyncpa %s24, 0
    %26 = vsyncpa [#allocation14], 0
    %s27 = scalar_lea.sflag [#allocation14], 1
    %28 = vsyncpa %s27, 0
    loop: start=0, step=1, limit=6
    $region2: #{tpu_custom_call.1} parent=1 // loop_pre_header
      _
    $region3: #{tpu_custom_call.1} parent=1 // loop_header
      %s30 = sphi 0, %s34
      %p31 = scmp.ge.s32.totalorder %s30, 6
      %s37 = sphi 0, %s49
      %s38 = sphi 0, %s45
      %s39 = sphi 0, %s37
      %s40 = sphi 0, %s38
      %s41 = sphi 0, %s39
      %s42 = sphi 0, %s40
      %s52 = sphi 0, %s54
      %s55 = sphi 0, %s52
      %s56 = sphi 0, %s55
      %s72 = sphi 0, %s56
      %s78 = sphi 0, %s80
      %s81 = sphi 0, %s78
      %s82 = sphi 0, %s81
      %s98 = sphi 0, %s82
      %s104 = sphi 0, %s106
      %s107 = sphi 0, %s104
      %s108 = sphi 0, %s107
      %s124 = sphi 0, %s108
      %s130 = sphi 0, %s132
      %s133 = sphi 0, %s130
      %s134 = sphi 0, %s133
      %s150 = sphi 0, %s134
      %s154 = sphi 0, %s154
      %s156 = sphi 0, %s154
      %s157 = sphi 0, %s156
      %s171 = sphi 0, %s157
      %s179 = sphi 0, %s181
      %s182 = sphi 0, %s179
      %s183 = sphi 0, %s182
      %s199 = sphi 0, %s183
      %s205 = sphi 0, %s207
      %s208 = sphi 0, %s205
      %s209 = sphi 0, %s208
      %s225 = sphi 0, %s209
      %s231 = sphi 0, %s233
      %s234 = sphi 0, %s231
      %s235 = sphi 0, %s234
      %s251 = sphi 0, %s235
      %s257 = sphi 0, %s259
      %s260 = sphi 0, %s257
      %s261 = sphi 0, %s260
      %s277 = sphi 0, %s261
    $region4: #{tpu_custom_call.1} parent=1 // loop_header_branch
      %33 = sbr.rel (%p31) target = $region8
    $region5: #{tpu_custom_call.1} parent=1 // loop_body
      %s35 = ssub.s32 %s30, 1
      %s36 = ssub.s32 %s30, 2
      %s43 = sadd.s32 1, %s38
      %p44 = scmp.ge.s32.totalorder %s43, 2
      %s45 = scalar_select %p44, 0, %s43
      %s46 = sadd.s32 1, %s37
      %s47 = scalar_select %p44, %s46, %s37
      %p48 = scmp.ge.s32.totalorder %s47, 2
      %s49 = scalar_select %p48, 0, %s47
      %s50 = ssub.s32 %s37, %s49
      %p51 = scmp.eq.s32.totalorder %s50, 0
      %s53 = sadd.s32 %s52, 1
      %s54 = scalar_select %p51, %s52, %s53
      %p57 = pneg %p51
      %p58 = scmp.eq.s32.totalorder %s30, 3
      %p59 = por %p57, %p58
      %p60 = scmp.ne.s32.totalorder %s52, %s55
      %p61 = scmp.eq.s32.totalorder %s30, 0
      %p62 = por %p60, %p61
      %p63 = scmp.ne.s32.totalorder %s52, %s55
      %p64 = scmp.eq.s32.totalorder %s35, 3
      %p65 = por %p63, %p64
      %p66 = scmp.ne.s32.totalorder %s55, %s56
      %p67 = scmp.eq.s32.totalorder %s35, 0
      %p68 = por %p66, %p67
      %p69 = scmp.ne.s32.totalorder %s55, %s56
      %p70 = scmp.eq.s32.totalorder %s36, 3
      %p71 = por %p69, %p70
      %p73 = scmp.ne.s32.totalorder %s56, %s72
      %p74 = scmp.eq.s32.totalorder %s36, 0
      %p75 = por %p73, %p74
      %s76 = ssub.s32 %s38, %s45
      %p77 = scmp.eq.s32.totalorder %s76, 0
      %s79 = sadd.s32 %s78, 1
      %s80 = scalar_select %p77, %s78, %s79
      %p83 = pneg %p77
      %p84 = scmp.eq.s32.totalorder %s30, 3
      %p85 = por %p83, %p84
      %p86 = scmp.ne.s32.totalorder %s78, %s81
      %p87 = scmp.eq.s32.totalorder %s30, 0
      %p88 = por %p86, %p87
      %p89 = scmp.ne.s32.totalorder %s78, %s81
      %p90 = scmp.eq.s32.totalorder %s35, 3
      %p91 = por %p89, %p90
      %p92 = scmp.ne.s32.totalorder %s81, %s82
      %p93 = scmp.eq.s32.totalorder %s35, 0
      %p94 = por %p92, %p93
      %p95 = scmp.ne.s32.totalorder %s81, %s82
      %p96 = scmp.eq.s32.totalorder %s36, 3
      %p97 = por %p95, %p96
      %p99 = scmp.ne.s32.totalorder %s82, %s98
      %p100 = scmp.eq.s32.totalorder %s36, 0
      %p101 = por %p99, %p100
      %s102 = ssub.s32 %s38, %s45
      %p103 = scmp.eq.s32.totalorder %s102, 0
      %s105 = sadd.s32 %s104, 1
      %s106 = scalar_select %p103, %s104, %s105
      %p109 = pneg %p103
      %p110 = scmp.eq.s32.totalorder %s30, 3
      %p111 = por %p109, %p110
      %p112 = scmp.ne.s32.totalorder %s104, %s107
      %p113 = scmp.eq.s32.totalorder %s30, 0
      %p114 = por %p112, %p113
      %p115 = scmp.ne.s32.totalorder %s104, %s107
      %p116 = scmp.eq.s32.totalorder %s35, 3
      %p117 = por %p115, %p116
      %p118 = scmp.ne.s32.totalorder %s107, %s108
      %p119 = scmp.eq.s32.totalorder %s35, 0
      %p120 = por %p118, %p119
      %p121 = scmp.ne.s32.totalorder %s107, %s108
      %p122 = scmp.eq.s32.totalorder %s36, 3
      %p123 = por %p121, %p122
      %p125 = scmp.ne.s32.totalorder %s108, %s124
      %p126 = scmp.eq.s32.totalorder %s36, 0
      %p127 = por %p125, %p126
      %s128 = ssub.s32 %s38, %s45
      %p129 = scmp.eq.s32.totalorder %s128, 0
      %s131 = sadd.s32 %s130, 1
      %s132 = scalar_select %p129, %s130, %s131
      %p135 = pneg %p129
      %p136 = scmp.eq.s32.totalorder %s30, 3
      %p137 = por %p135, %p136
      %p138 = scmp.ne.s32.totalorder %s130, %s133
      %p139 = scmp.eq.s32.totalorder %s30, 0
      %p140 = por %p138, %p139
      %p141 = scmp.ne.s32.totalorder %s130, %s133
      %p142 = scmp.eq.s32.totalorder %s35, 3
      %p143 = por %p141, %p142
      %p144 = scmp.ne.s32.totalorder %s133, %s134
      %p145 = scmp.eq.s32.totalorder %s35, 0
      %p146 = por %p144, %p145
      %p147 = scmp.ne.s32.totalorder %s133, %s134
      %p148 = scmp.eq.s32.totalorder %s36, 3
      %p149 = por %p147, %p148
      %p151 = scmp.ne.s32.totalorder %s134, %s150
      %p152 = scmp.eq.s32.totalorder %s36, 0
      %p153 = por %p151, %p152
      %s155 = sadd.s32 %s154, 1
      %p158 = scmp.eq.s32.totalorder %s30, 3
      %p159 = scmp.ne.s32.totalorder %s154, %s156
      %p160 = scmp.eq.s32.totalorder %s30, 0
      %p161 = por %p159, %p160
      %p162 = scmp.ne.s32.totalorder %s154, %s156
      %p163 = scmp.eq.s32.totalorder %s35, 3
      %p164 = por %p162, %p163
      %p165 = scmp.ne.s32.totalorder %s156, %s157
      %p166 = scmp.eq.s32.totalorder %s35, 0
      %p167 = por %p165, %p166
      %p168 = scmp.ne.s32.totalorder %s156, %s157
      %p169 = scmp.eq.s32.totalorder %s36, 3
      %p170 = por %p168, %p169
      %p172 = scmp.ne.s32.totalorder %s157, %s171
      %p173 = scmp.eq.s32.totalorder %s36, 0
      %p174 = por %p172, %p173
      %s175 = ssub.s32 %s37, %s49
      %s176 = ssub.s32 %s38, %s45
      %s177 = sor.u32 %s175, %s176
      %p178 = scmp.eq.s32.totalorder %s177, 0
      %s180 = sadd.s32 %s179, 1
      %s181 = scalar_select %p178, %s179, %s180
      %p184 = pneg %p178
      %p185 = scmp.eq.s32.totalorder %s30, 3
      %p186 = por %p184, %p185
      %p187 = scmp.ne.s32.totalorder %s179, %s182
      %p188 = scmp.eq.s32.totalorder %s30, 0
      %p189 = por %p187, %p188
      %p190 = scmp.ne.s32.totalorder %s179, %s182
      %p191 = scmp.eq.s32.totalorder %s35, 3
      %p192 = por %p190, %p191
      %p193 = scmp.ne.s32.totalorder %s182, %s183
      %p194 = scmp.eq.s32.totalorder %s35, 0
      %p195 = por %p193, %p194
      %p196 = scmp.ne.s32.totalorder %s182, %s183
      %p197 = scmp.eq.s32.totalorder %s36, 3
      %p198 = por %p196, %p197
      %p200 = scmp.ne.s32.totalorder %s183, %s199
      %p201 = scmp.eq.s32.totalorder %s36, 0
      %p202 = por %p200, %p201
      %s203 = ssub.s32 %s37, %s49
      %p204 = scmp.eq.s32.totalorder %s203, 0
      %s206 = sadd.s32 %s205, 1
      %s207 = scalar_select %p204, %s205, %s206
      %p210 = pneg %p204
      %p211 = scmp.eq.s32.totalorder %s30, 3
      %p212 = por %p210, %p211
      %p213 = scmp.ne.s32.totalorder %s205, %s208
      %p214 = scmp.eq.s32.totalorder %s30, 0
      %p215 = por %p213, %p214
      %p216 = scmp.ne.s32.totalorder %s205, %s208
      %p217 = scmp.eq.s32.totalorder %s35, 3
      %p218 = por %p216, %p217
      %p219 = scmp.ne.s32.totalorder %s208, %s209
      %p220 = scmp.eq.s32.totalorder %s35, 0
      %p221 = por %p219, %p220
      %p222 = scmp.ne.s32.totalorder %s208, %s209
      %p223 = scmp.eq.s32.totalorder %s36, 3
      %p224 = por %p222, %p223
      %p226 = scmp.ne.s32.totalorder %s209, %s225
      %p227 = scmp.eq.s32.totalorder %s36, 0
      %p228 = por %p226, %p227
      %s229 = ssub.s32 %s37, %s49
      %p230 = scmp.eq.s32.totalorder %s229, 0
      %s232 = sadd.s32 %s231, 1
      %s233 = scalar_select %p230, %s231, %s232
      %p236 = pneg %p230
      %p237 = scmp.eq.s32.totalorder %s30, 3
      %p238 = por %p236, %p237
      %p239 = scmp.ne.s32.totalorder %s231, %s234
      %p240 = scmp.eq.s32.totalorder %s30, 0
      %p241 = por %p239, %p240
      %p242 = scmp.ne.s32.totalorder %s231, %s234
      %p243 = scmp.eq.s32.totalorder %s35, 3
      %p244 = por %p242, %p243
      %p245 = scmp.ne.s32.totalorder %s234, %s235
      %p246 = scmp.eq.s32.totalorder %s35, 0
      %p247 = por %p245, %p246
      %p248 = scmp.ne.s32.totalorder %s234, %s235
      %p249 = scmp.eq.s32.totalorder %s36, 3
      %p250 = por %p248, %p249
      %p252 = scmp.ne.s32.totalorder %s235, %s251
      %p253 = scmp.eq.s32.totalorder %s36, 0
      %p254 = por %p252, %p253
      %s255 = ssub.s32 %s37, %s49
      %p256 = scmp.eq.s32.totalorder %s255, 0
      %s258 = sadd.s32 %s257, 1
      %s259 = scalar_select %p256, %s257, %s258
      %p262 = pneg %p256
      %p263 = scmp.eq.s32.totalorder %s30, 3
      %p264 = por %p262, %p263
      %p265 = scmp.ne.s32.totalorder %s257, %s260
      %p266 = scmp.eq.s32.totalorder %s30, 0
      %p267 = por %p265, %p266
      %p268 = scmp.ne.s32.totalorder %s257, %s260
      %p269 = scmp.eq.s32.totalorder %s35, 3
      %p270 = por %p268, %p269
      %p271 = scmp.ne.s32.totalorder %s260, %s261
      %p272 = scmp.eq.s32.totalorder %s35, 0
      %p273 = por %p271, %p272
      %p274 = scmp.ne.s32.totalorder %s260, %s261
      %p275 = scmp.eq.s32.totalorder %s36, 3
      %p276 = por %p274, %p275
      %p278 = scmp.ne.s32.totalorder %s261, %s277
      %p279 = scmp.eq.s32.totalorder %s36, 0
      %p280 = por %p278, %p279
      %p281 = scmp.le.s32.totalorder 1, %s30
      %p282 = scmp.lt.s32.totalorder %s30, 5
      %p283 = pnand %p281, %p282
      %p284 = pneg %p283
      // Predicated region
      $region9: #{tpu_custom_call.1} parent=5 // pred_check
        _
      $region10: #{tpu_custom_call.1} parent=5 // pred_check_branch
        %286 = sbr.rel (%p283) target = $region12
      $region11: #{tpu_custom_call.1} parent=5 // pred_region
        %s287 = ssub.s32 %s30, 1
        // Predicated region
        $region13: #{tpu_custom_call.1} parent=11 // pred_check
          %p288 = pneg %p167
        $region14: #{tpu_custom_call.1} parent=11 // pred_check_branch
          %290 = sbr.rel (%p288) target = $region16
        $region15: #{tpu_custom_call.1} parent=11 // pred_region
          _
        $region16: #{tpu_custom_call.1} parent=11 // pred_fallthru
          _
      $region12: #{tpu_custom_call.1} parent=5 // pred_fallthru
        _
      %p291 = scmp.lt.s32.totalorder %s30, 4
      // Predicated region
      $region17: #{tpu_custom_call.1} parent=5 // pred_check
        %p292 = pneg %p291
      $region18: #{tpu_custom_call.1} parent=5 // pred_check_branch
        %294 = sbr.rel (%p292) target = $region20
      $region19: #{tpu_custom_call.1} parent=5 // pred_region
        // Predicated region
        $region21: #{tpu_custom_call.1} parent=19 // pred_check
          %p295 = pneg %p62
        $region22: #{tpu_custom_call.1} parent=19 // pred_check_branch
          %297 = sbr.rel (%p295) target = $region24
        $region23: #{tpu_custom_call.1} parent=19 // pred_region
          %s298 = sand.u32 %s52, 1
          %s299 = scalar_lea.sflag [#allocation5], %s298
          %s300 = sand.u32 %s52, 1
          %s301 = smul.addr %s300, 8
          %s302 = scalar_lea.vmem [#allocation4], %s301
          %s304 = ssub.s32 128, 128
          %305 = vsyncadd %s299, %s304
          %s306 = smul.addr %s37, 128
          %s307 = scalar_lea.hbm %s0, %s306
          %s309 = sshll.u32 %s302, 4
          %s310 = int_to_ptr.vmem [resolvable:$true] %s309
          %312 = dma.hbm_to_vmem [thread:$0]  %s307, 128, %s310, %s299
        $region24: #{tpu_custom_call.1} parent=19 // pred_fallthru
          _
        // Predicated region
        $region25: #{tpu_custom_call.1} parent=19 // pred_check
          %p313 = pneg %p88
        $region26: #{tpu_custom_call.1} parent=19 // pred_check_branch
          %315 = sbr.rel (%p313) target = $region28
        $region27: #{tpu_custom_call.1} parent=19 // pred_region
          %s316 = sand.u32 %s30, 1
          %s317 = scalar_lea.sflag [#allocation8], %s316
          %s318 = sand.u32 %s78, 1
          %s319 = smul.addr %s318, 32
          %s320 = scalar_lea.vmem [#allocation7], %s319
          %s322 = ssub.s32 512, 512
          %323 = vsyncadd %s317, %s322
          %s324 = smul.addr %s38, 4
          %s325 = smul.addr %s324, 128
          %s326 = scalar_lea.hbm %s1, %s325
          %s327 = sshll.u32 %s320, 4
          %s328 = int_to_ptr.vmem [resolvable:$true] %s327
          %333 = dma.hbm_to_vmem [thread:$0]  %s326, 512, %s328, %s317, 128, 128, 8
        $region28: #{tpu_custom_call.1} parent=19 // pred_fallthru
          _
        // Predicated region
        $region29: #{tpu_custom_call.1} parent=19 // pred_check
          %p334 = pneg %p114
        $region30: #{tpu_custom_call.1} parent=19 // pred_check_branch
          %336 = sbr.rel (%p334) target = $region32
        $region31: #{tpu_custom_call.1} parent=19 // pred_region
          %p337 = scmp.lt.s32.totalorder %s38, 1
          %s338 = scalar_select %p337, %s38, 1
          %s339 = scalar_lea.vmem %s2, %s338
        $region32: #{tpu_custom_call.1} parent=19 // pred_fallthru
          _
        // Predicated region
        $region33: #{tpu_custom_call.1} parent=19 // pred_check
          %p340 = pneg %p140
        $region34: #{tpu_custom_call.1} parent=19 // pred_check_branch
          %342 = sbr.rel (%p340) target = $region36
        $region35: #{tpu_custom_call.1} parent=19 // pred_region
          %s343 = sand.u32 %s30, 1
          %s344 = scalar_lea.sflag [#allocation8], %s343
          %s345 = sand.u32 %s130, 1
          %s346 = smul.addr %s345, 16
          %s347 = scalar_lea.vmem [#allocation9], %s346
          %s349 = ssub.s32 256, 256
          %350 = vsyncadd %s344, %s349
          %s351 = smul.addr %s38, 2
          %s352 = smul.addr %s351, 128
          %s353 = scalar_lea.hbm %s3, %s352
          %s354 = sshll.u32 %s347, 4
          %s355 = int_to_ptr.vmem [resolvable:$true] %s354
          %360 = dma.hbm_to_vmem [thread:$0]  %s353, 256, %s355, %s344, 128, 128, 8
        $region36: #{tpu_custom_call.1} parent=19 // pred_fallthru
          _
        // Predicated region
        $region37: #{tpu_custom_call.1} parent=19 // pred_check
          %p361 = pneg %p189
        $region38: #{tpu_custom_call.1} parent=19 // pred_check_branch
          %363 = sbr.rel (%p361) target = $region40
        $region39: #{tpu_custom_call.1} parent=19 // pred_region
          %s364 = sand.u32 %s179, 1
          %s365 = scalar_lea.sflag [#allocation11], %s364
          %s366 = sand.u32 %s179, 1
          %s367 = smul.addr %s366, 16
          %s368 = scalar_lea.vmem [#allocation10], %s367
          %s369 = smul.u32 2, %s38
          %s371 = ssub.s32 256, 256
          %372 = vsyncadd %s365, %s371
          %s373 = smul.addr %s37, 4
          %s374 = sadd.s32 %s369, %s373
          %s375 = smul.addr %s374, 128
          %s376 = scalar_lea.hbm %s5, %s375
          %s377 = sshll.u32 %s368, 4
          %s378 = int_to_ptr.vmem [resolvable:$true] %s377
          %383 = dma.hbm_to_vmem [thread:$0]  %s376, 256, %s378, %s365, 128, 128, 8
        $region40: #{tpu_custom_call.1} parent=19 // pred_fallthru
          _
        // Predicated region
        $region41: #{tpu_custom_call.1} parent=19 // pred_check
          %p384 = pneg %p215
        $region42: #{tpu_custom_call.1} parent=19 // pred_check_branch
          %386 = sbr.rel (%p384) target = $region44
        $region43: #{tpu_custom_call.1} parent=19 // pred_region
          %p387 = scmp.lt.s32.totalorder %s37, 1
          %s388 = scalar_select %p387, %s37, 1
          %s389 = scalar_lea.vmem %s6, %s388
        $region44: #{tpu_custom_call.1} parent=19 // pred_fallthru
          _
      $region20: #{tpu_custom_call.1} parent=5 // pred_fallthru
        _
      %p390 = scmp.le.s32.totalorder 1, %s30
      %p391 = scmp.lt.s32.totalorder %s30, 5
      %p392 = pnand %p390, %p391
      %p393 = pneg %p392
      // Predicated region
      $region45: #{tpu_custom_call.1} parent=5 // pred_check
        _
      $region46: #{tpu_custom_call.1} parent=5 // pred_check_branch
        %395 = sbr.rel (%p392) target = $region48
      $region47: #{tpu_custom_call.1} parent=5 // pred_region
        %s396 = ssub.s32 %s30, 1
        %s397 = sand.u32 %s55, 1
        %s398 = scalar_lea.sflag [#allocation5], %s397
        %s399 = sand.u32 %s55, 1
        %s400 = smul.addr %s399, 8
        %s401 = scalar_lea.vmem [#allocation4], %s400
        // Predicated region
        $region49: #{tpu_custom_call.1} parent=47 // pred_check
          %p402 = pneg %p68
        $region50: #{tpu_custom_call.1} parent=47 // pred_check_branch
          %404 = sbr.rel (%p402) target = $region52
        $region51: #{tpu_custom_call.1} parent=47 // pred_region
          %405 = dma.done %s398, 128
        $region52: #{tpu_custom_call.1} parent=47 // pred_fallthru
          _
        %s406 = sand.u32 %s35, 1
        %s407 = scalar_lea.sflag [#allocation8], %s406
        %s408 = sand.u32 %s81, 1
        %s409 = smul.addr %s408, 32
        %s410 = scalar_lea.vmem [#allocation7], %s409
        // Predicated region
        $region53: #{tpu_custom_call.1} parent=47 // pred_check
          %p411 = pneg %p94
        $region54: #{tpu_custom_call.1} parent=47 // pred_check_branch
          %413 = sbr.rel (%p411) target = $region56
        $region55: #{tpu_custom_call.1} parent=47 // pred_region
          %414 = dma.done %s407, 512
        $region56: #{tpu_custom_call.1} parent=47 // pred_fallthru
          _
        %s415 = sand.u32 %s35, 1
        %s416 = scalar_lea.sflag [#allocation8], %s415
        %s417 = sand.u32 %s133, 1
        %s418 = smul.addr %s417, 16
        %s419 = scalar_lea.vmem [#allocation9], %s418
        // Predicated region
        $region57: #{tpu_custom_call.1} parent=47 // pred_check
          %p420 = pneg %p146
        $region58: #{tpu_custom_call.1} parent=47 // pred_check_branch
          %422 = sbr.rel (%p420) target = $region60
        $region59: #{tpu_custom_call.1} parent=47 // pred_region
          %423 = dma.done %s416, 256
        $region60: #{tpu_custom_call.1} parent=47 // pred_fallthru
          _
        %s424 = sand.u32 %s182, 1
        %s425 = scalar_lea.sflag [#allocation11], %s424
        %s426 = sand.u32 %s182, 1
        %s427 = smul.addr %s426, 16
        %s428 = scalar_lea.vmem [#allocation10], %s427
        // Predicated region
        $region61: #{tpu_custom_call.1} parent=47 // pred_check
          %p429 = pneg %p195
        $region62: #{tpu_custom_call.1} parent=47 // pred_check_branch
          %431 = sbr.rel (%p429) target = $region64
        $region63: #{tpu_custom_call.1} parent=47 // pred_region
          %432 = dma.done %s425, 256
        $region64: #{tpu_custom_call.1} parent=47 // pred_fallthru
          _
        %s433 = sand.u32 %s55, 1
        %s434 = scalar_lea.sflag [#allocation5], %s433
        %s435 = sand.u32 %s55, 1
        %s436 = smul.addr %s435, 8
        %s437 = scalar_lea.vmem [#allocation4], %s436
        %p438 = pneg %p68
        %p439 = pneg %p65
        %s440 = sand.u32 %s35, 1
        %s441 = scalar_lea.sflag [#allocation8], %s440
        %s442 = sand.u32 %s81, 1
        %s443 = smul.addr %s442, 32
        %s444 = scalar_lea.vmem [#allocation7], %s443
        %p445 = pneg %p94
        %p446 = pneg %p91
        %p447 = scmp.lt.s32.totalorder %s40, 1
        %s448 = scalar_select %p447, %s40, 1
        %s449 = scalar_lea.vmem %s2, %s448
        %p450 = pneg %p120
        %p451 = pneg %p117
        %s452 = sand.u32 %s35, 1
        %s453 = scalar_lea.sflag [#allocation8], %s452
        %s454 = sand.u32 %s133, 1
        %s455 = smul.addr %s454, 16
        %s456 = scalar_lea.vmem [#allocation9], %s455
        %p457 = pneg %p146
        %p458 = pneg %p143
        %p459 = pneg %p167
        %p460 = pneg %p164
        %s461 = sand.u32 %s182, 1
        %s462 = scalar_lea.sflag [#allocation11], %s461
        %s463 = sand.u32 %s182, 1
        %s464 = smul.addr %s463, 16
        %s465 = scalar_lea.vmem [#allocation10], %s464
        %p466 = pneg %p195
        %p467 = pneg %p192
        %p468 = scmp.lt.s32.totalorder %s39, 1
        %s469 = scalar_select %p468, %s39, 1
        %s470 = scalar_lea.vmem %s6, %s469
        %p471 = pneg %p221
        %p472 = pneg %p218
        %p473 = pneg %p247
        %p474 = pneg %p244
        %s475 = sand.u32 %s234, 1
        %s476 = scalar_lea.sflag [#allocation6], %s475
        %s477 = sand.u32 %s234, 1
        %s478 = smul.addr %s477, 8
        %s479 = scalar_lea.vmem [#allocation12], %s478
        %p480 = pneg %p273
        %p481 = pneg %p270
        %s482 = sand.u32 %s260, 1
        %s483 = scalar_lea.sflag [#allocation14], %s482
        %s484 = sand.u32 %s260, 1
        %s485 = smul.addr %s484, 8
        %s486 = scalar_lea.vmem [#allocation13], %s485
        %p487 = scmp.lt.s32.totalorder %s40, 1
        %s488 = scalar_select %p487, %s40, 1
        %s489 = scalar_lea.vmem %s2, %s488
        %s490 = smul.u32 2, %s40
        %p491 = scmp.lt.s32.totalorder %s39, 1
        %s492 = scalar_select %p491, %s39, 1
        %s493 = scalar_lea.vmem %s6, %s492
        %p494 = scmp.eq.s32.totalorder %s40, 0
        // Predicated region
        $region65: #{tpu_custom_call.1} parent=47 // pred_check
          %p495 = pneg %p494
        $region66: #{tpu_custom_call.1} parent=47 // pred_check_branch
          %497 = sbr.rel (%p495) target = $region68
        $region67: #{tpu_custom_call.1} parent=47 // pred_region
          %v498 = vld [vmem:[%s4] sm:$0x1]
          %v500 = vlaneseq
          %v501 = vshrl.u32 %v500, 7
          %v502 = vsub.s32 0, %v501
          %v503 = vrot.slane %v498, %v502
          %vm505 = vcmask 261120
          %506 = vst.msk [vmem:[%s479] sm:$0xff] %vm505, %v503
          %vm507 = vcmask 64512
          %508 = vst.msk [vmem:[%s486] sm:$0xff] %vm507, 0.0
        $region68: #{tpu_custom_call.1} parent=47 // pred_fallthru
          _
        %v509 = vld [vmem:[%s401] sm:$0xff]
        %v510 = vld [vmem:[%s410] sm:$0xff]
        %v511 = vld [vmem:[%s410 + $0x8] sm:$0xff]
        %v512 = vld [vmem:[%s410 + $0x10] sm:$0xff]
        %v513 = vld [vmem:[%s410 + $0x18] sm:$0xff]
        %v514 = vld [vmem:[%s489] sm:$0x1]
        %v516 = vlaneseq
        %v517 = vshrl.u32 %v516, 7
        %v518 = vsub.s32 0, %v517
        %v519 = vrot.slane %v514, %v518
        %vm521 = vcmask 261120
        %v523 = vsel %vm521, %v509, 0
        %525 = vmatprep.subr.mxu0 0.0
        %526 = vmatpush1.msra.mxu0 0.0
        %527 = vmatprep.subr.mxu0 0.0
        %528 = vmatpush1.msra.mxu0 0.0
        %529 = vmatprep.subr.mxu0 0.0
        %530 = vmatpush1.msra.mxu0 0.0
        %531 = vmatprep.subr.mxu0 0.0
        %532 = vmatpush1.msra.mxu0 0.0
        %533 = vmatprep.subr.mxu0 0.0
        %534 = vmatpush1.msra.mxu0 0.0
        %535 = vmatprep.subr.mxu0 0.0
        %536 = vmatpush1.msra.mxu0 0.0
        %537 = vmatprep.subr.mxu0 0.0
        %538 = vmatpush1.msra.mxu0 0.0
        %539 = vmatprep.subr.mxu0 0.0
        %540 = vmatpush1.msra.mxu0 0.0
        %541 = vmatprep.subr.mxu0 0.0
        %542 = vmatpush1.msra.mxu0 0.0
        %543 = vmatprep.subr.mxu0 0.0
        %544 = vmatpush1.msra.mxu0 0.0
        %545 = vmatprep.subr.mxu0 0.0
        %546 = vmatpush1.msra.mxu0 0.0
        %547 = vmatprep.subr.mxu0 0.0
        %548 = vmatpush1.msra.mxu0 0.0
        %549 = vmatprep.subr.mxu0 0.0
        %550 = vmatpush1.msra.mxu0 %v513
        %551 = vmatprep.subr.mxu0 0.0
        %552 = vmatpush1.msra.mxu0 %v512
        %553 = vmatprep.subr.mxu0 0.0
        %554 = vmatpush1.msra.mxu0 %v511
        %555 = vmatprep.subr.mxu0 0.0
        %556 = vmatpush1.msra.mxu0 %v510
        %557 = vmatprep.subr.mxu0 0.0
        %558 = vmatpush2.msra.mxu0 0.0
        %559 = vmatprep.subr.mxu0 0.0
        %560 = vmatpush2.msra.mxu0 0.0
        %561 = vmatprep.subr.mxu0 0.0
        %562 = vmatpush2.msra.mxu0 0.0
        %563 = vmatprep.subr.mxu0 0.0
        %564 = vmatpush2.msra.mxu0 0.0
        %565 = vmatprep.subr.mxu0 0.0
        %566 = vmatpush2.msra.mxu0 0.0
        %567 = vmatprep.subr.mxu0 0.0
        %568 = vmatpush2.msra.mxu0 0.0
        %569 = vmatprep.subr.mxu0 0.0
        %570 = vmatpush2.msra.mxu0 0.0
        %571 = vmatprep.subr.mxu0 0.0
        %572 = vmatpush2.msra.mxu0 0.0
        %573 = vmatprep.subr.mxu0 0.0
        %574 = vmatpush2.msra.mxu0 0.0
        %575 = vmatprep.subr.mxu0 0.0
        %576 = vmatpush2.msra.mxu0 0.0
        %577 = vmatprep.subr.mxu0 0.0
        %578 = vmatpush2.msra.mxu0 0.0
        %579 = vmatprep.subr.mxu0 0.0
        %580 = vmatpush2.msra.mxu0 0.0
        %581 = vmatprep.subr.mxu0 0.0
        %582 = vmatpush2.msra.mxu0 0.0
        %583 = vmatprep.subr.mxu0 0.0
        %584 = vmatpush2.msra.mxu0 0.0
        %585 = vmatprep.subr.mxu0 0.0
        %586 = vmatpush2.msra.mxu0 0.0
        %587 = vmatprep.subr.mxu0 0.0
        %588 = vmatpush2.msra.mxu0 0.0
        %589 = vmatprep.mubr.f32.mxu0 0.0
        %590 = vmatmul.mubr.f32.gmra.mxu0 %v523
        %v591 = vpop.f32.mrf.mxu0
        %v592 = vadd.f32 %v519, %v591
        %v593 = vpop.f32.mrf.mxu0
        %594 = vdwg.mxu0
        %vm595 = vcmask 392192
        %596 = vst.msk [vmem:[#allocation2] sm:$0xff] %vm595, %v592
        %v597 = vld [vmem:[%s493] sm:$0x1]
        %v598 = vld [vmem:[#allocation2] sm:$0xff]
        %v599 = vld [vmem:[%s428] sm:$0xff]
        %601 = vrot.lane.b32.xlu0 %v598, 112
        %v602 = vpop.permute.xlu0 %601
        %vm603 = vcmask 64512
        %v604 = vsel %vm603, %v598, 0
        %v606 = vsel %vm603, %v602, 0
        %608 = vmatprep.subr.mxu0 0.0
        %609 = vmatpush1.xpose.msra.mxu0 0.0
        %610 = vmatprep.subr.mxu0 0.0
        %611 = vmatpush1.xpose.msra.mxu0 0.0
        %612 = vmatprep.subr.mxu0 0.0
        %613 = vmatpush1.xpose.msra.mxu0 0.0
        %614 = vmatprep.subr.mxu0 0.0
        %615 = vmatpush1.xpose.msra.mxu0 0.0
        %616 = vmatprep.subr.mxu0 0.0
        %617 = vmatpush1.xpose.msra.mxu0 0.0
        %618 = vmatprep.subr.mxu0 0.0
        %619 = vmatpush1.xpose.msra.mxu0 0.0
        %620 = vmatprep.subr.mxu0 0.0
        %621 = vmatpush1.xpose.msra.mxu0 0.0
        %622 = vmatprep.subr.mxu0 0.0
        %623 = vmatpush1.xpose.msra.mxu0 0.0
        %624 = vmatprep.subr.mxu0 0.0
        %625 = vmatpush1.xpose.msra.mxu0 0.0
        %626 = vmatprep.subr.mxu0 0.0
        %627 = vmatpush1.xpose.msra.mxu0 0.0
        %628 = vmatprep.subr.mxu0 0.0
        %629 = vmatpush1.xpose.msra.mxu0 0.0
        %630 = vmatprep.subr.mxu0 0.0
        %631 = vmatpush1.xpose.msra.mxu0 0.0
        %632 = vmatprep.subr.mxu0 0.0
        %633 = vmatpush1.xpose.msra.mxu0 0.0
        %634 = vmatprep.subr.mxu0 0.0
        %635 = vmatpush1.xpose.msra.mxu0 0.0
        %636 = vmatprep.subr.mxu0 0.0
        %637 = vmatpush1.xpose.msra.mxu0 0.0
        %638 = vmatprep.subr.mxu0 0.0
        %639 = vmatpush1.xpose.msra.mxu0 %v606
        %640 = vmatprep.subr.mxu0 0.0
        %641 = vmatpush2.xpose.msra.mxu0 0.0
        %642 = vmatprep.subr.mxu0 0.0
        %643 = vmatpush2.xpose.msra.mxu0 0.0
        %644 = vmatprep.subr.mxu0 0.0
        %645 = vmatpush2.xpose.msra.mxu0 0.0
        %646 = vmatprep.subr.mxu0 0.0
        %647 = vmatpush2.xpose.msra.mxu0 0.0
        %648 = vmatprep.subr.mxu0 0.0
        %649 = vmatpush2.xpose.msra.mxu0 0.0
        %650 = vmatprep.subr.mxu0 0.0
        %651 = vmatpush2.xpose.msra.mxu0 0.0
        %652 = vmatprep.subr.mxu0 0.0
        %653 = vmatpush2.xpose.msra.mxu0 0.0
        %654 = vmatprep.subr.mxu0 0.0
        %655 = vmatpush2.xpose.msra.mxu0 0.0
        %656 = vmatprep.subr.mxu0 0.0
        %657 = vmatpush2.xpose.msra.mxu0 0.0
        %658 = vmatprep.subr.mxu0 0.0
        %659 = vmatpush2.xpose.msra.mxu0 0.0
        %660 = vmatprep.subr.mxu0 0.0
        %661 = vmatpush2.xpose.msra.mxu0 0.0
        %662 = vmatprep.subr.mxu0 0.0
        %663 = vmatpush2.xpose.msra.mxu0 0.0
        %664 = vmatprep.subr.mxu0 0.0
        %665 = vmatpush2.xpose.msra.mxu0 0.0
        %666 = vmatprep.subr.mxu0 0.0
        %667 = vmatpush2.xpose.msra.mxu0 0.0
        %668 = vmatprep.subr.mxu0 0.0
        %669 = vmatpush2.xpose.msra.mxu0 0.0
        %670 = vmatprep.subr.mxu0 0.0
        %671 = vmatpush2.xpose.msra.mxu0 0.0
        %672 = vmatprep.mubr.f32.mxu0 0.0
        %673 = vmatmul.mubr.f32.gmra.mxu0 %v604
        %v674 = vpop.f32.mrf.mxu0
        %v675 = vadd.f32 %v599, %v674
        %v676 = vpop.f32.mrf.mxu0
        %677 = vdwg.mxu0
        %vm678 = vcmp.gt.f32.partialorder %v597, 0.5
        %v679 = vsel %vm678, 1, 0
        %v680 = vlaneseq
        %v681 = vshrl.u32 %v680, 7
        %v682 = vsub.s32 0, %v681
        %v683 = vrot.slane %v679, %v682
        %vm684 = vcmp.eq.s32.totalorder %v683, 1
        %v685 = vsel %vm684, -1e+30, %v675
        %v686 = vsel %vm603, %v685, -inf
        %687 = vmax.xlane.f32.xlu0 %v686
        %v688 = vpop.xlane.xlu0 %687
        %v689 = vsub.f32 %v685, %v688
        %v690 = vmul.f32 %v689, 1.442695
        %v691 = vpow.pop %v690
        %v692 = vsel %vm603, %v691, 0.0
        %693 = vadd.xlane.f32.xlu0 %v692
        %v694 = vpop.xlane.xlu0 %693
        %v695 = vrcp.pop %v694
        %v696 = vmul.f32 %v691, %v695
        %v697 = vld [vmem:[%s486] sm:$0xff]
        %v698 = vmul.f32 %v696, 0.25
        %v699 = vadd.f32 %v697, %v698
        %700 = vst.msk [vmem:[%s486] sm:$0xff] %vm603, %v699
        %701 = vrot.lane.b32.xlu0 %v598, 96
        %v702 = vpop.permute.xlu0 %701
        %v705 = vsel %vm603, %v696, 0
        %707 = vmatprep.subr.mxu0 0.0
        %708 = vmatpush1.msra.mxu0 0.0
        %709 = vmatprep.subr.mxu0 0.0
        %710 = vmatpush1.msra.mxu0 0.0
        %711 = vmatprep.subr.mxu0 0.0
        %712 = vmatpush1.msra.mxu0 0.0
        %713 = vmatprep.subr.mxu0 0.0
        %714 = vmatpush1.msra.mxu0 0.0
        %715 = vmatprep.subr.mxu0 0.0
        %716 = vmatpush1.msra.mxu0 0.0
        %717 = vmatprep.subr.mxu0 0.0
        %718 = vmatpush1.msra.mxu0 0.0
        %719 = vmatprep.subr.mxu0 0.0
        %720 = vmatpush1.msra.mxu0 0.0
        %721 = vmatprep.subr.mxu0 0.0
        %722 = vmatpush1.msra.mxu0 0.0
        %723 = vmatprep.subr.mxu0 0.0
        %724 = vmatpush1.msra.mxu0 0.0
        %725 = vmatprep.subr.mxu0 0.0
        %726 = vmatpush1.msra.mxu0 0.0
        %727 = vmatprep.subr.mxu0 0.0
        %728 = vmatpush1.msra.mxu0 0.0
        %729 = vmatprep.subr.mxu0 0.0
        %730 = vmatpush1.msra.mxu0 0.0
        %731 = vmatprep.subr.mxu0 0.0
        %732 = vmatpush1.msra.mxu0 0.0
        %733 = vmatprep.subr.mxu0 0.0
        %734 = vmatpush1.msra.mxu0 0.0
        %735 = vmatprep.subr.mxu0 0.0
        %736 = vmatpush1.msra.mxu0 0.0
        %737 = vmatprep.subr.mxu0 0.0
        %738 = vmatpush1.msra.mxu0 %v702
        %739 = vmatprep.subr.mxu0 0.0
        %740 = vmatpush2.msra.mxu0 0.0
        %741 = vmatprep.subr.mxu0 0.0
        %742 = vmatpush2.msra.mxu0 0.0
        %743 = vmatprep.subr.mxu0 0.0
        %744 = vmatpush2.msra.mxu0 0.0
        %745 = vmatprep.subr.mxu0 0.0
        %746 = vmatpush2.msra.mxu0 0.0
        %747 = vmatprep.subr.mxu0 0.0
        %748 = vmatpush2.msra.mxu0 0.0
        %749 = vmatprep.subr.mxu0 0.0
        %750 = vmatpush2.msra.mxu0 0.0
        %751 = vmatprep.subr.mxu0 0.0
        %752 = vmatpush2.msra.mxu0 0.0
        %753 = vmatprep.subr.mxu0 0.0
        %754 = vmatpush2.msra.mxu0 0.0
        %755 = vmatprep.subr.mxu0 0.0
        %756 = vmatpush2.msra.mxu0 0.0
        %757 = vmatprep.subr.mxu0 0.0
        %758 = vmatpush2.msra.mxu0 0.0
        %759 = vmatprep.subr.mxu0 0.0
        %760 = vmatpush2.msra.mxu0 0.0
        %761 = vmatprep.subr.mxu0 0.0
        %762 = vmatpush2.msra.mxu0 0.0
        %763 = vmatprep.subr.mxu0 0.0
        %764 = vmatpush2.msra.mxu0 0.0
        %765 = vmatprep.subr.mxu0 0.0
        %766 = vmatpush2.msra.mxu0 0.0
        %767 = vmatprep.subr.mxu0 0.0
        %768 = vmatpush2.msra.mxu0 0.0
        %769 = vmatprep.subr.mxu0 0.0
        %770 = vmatpush2.msra.mxu0 0.0
        %771 = vmatprep.mubr.f32.mxu0 0.0
        %772 = vmatmul.mubr.f32.gmra.mxu0 %v705
        %v773 = vpop.f32.mrf.mxu0
        %v774 = vadd.f32 0.0, %v773
        %v775 = vpop.f32.mrf.mxu0
        %776 = vdwg.mxu0
        %777 = vst.msk [vmem:[#allocation3] sm:$0xff] %vm603, %v774
        %v778 = vld [vmem:[#allocation2] sm:$0xff]
        %s779 = scalar_lea.vmem %s428, 8 [#allocation10]
        %v780 = vld [vmem:[%s779] sm:$0xff]
        %782 = vrot.lane.b32.xlu0 %v778, 120
        %v783 = vpop.permute.xlu0 %782
        %784 = vrot.lane.b32.xlu0 %v778, 104
        %v785 = vpop.permute.xlu0 %784
        %v786 = vsel %vm603, %v783, 0
        %v788 = vsel %vm603, %v785, 0
        %790 = vmatprep.subr.mxu0 0.0
        %791 = vmatpush1.xpose.msra.mxu0 0.0
        %792 = vmatprep.subr.mxu0 0.0
        %793 = vmatpush1.xpose.msra.mxu0 0.0
        %794 = vmatprep.subr.mxu0 0.0
        %795 = vmatpush1.xpose.msra.mxu0 0.0
        %796 = vmatprep.subr.mxu0 0.0
        %797 = vmatpush1.xpose.msra.mxu0 0.0
        %798 = vmatprep.subr.mxu0 0.0
        %799 = vmatpush1.xpose.msra.mxu0 0.0
        %800 = vmatprep.subr.mxu0 0.0
        %801 = vmatpush1.xpose.msra.mxu0 0.0
        %802 = vmatprep.subr.mxu0 0.0
        %803 = vmatpush1.xpose.msra.mxu0 0.0
        %804 = vmatprep.subr.mxu0 0.0
        %805 = vmatpush1.xpose.msra.mxu0 0.0
        %806 = vmatprep.subr.mxu0 0.0
        %807 = vmatpush1.xpose.msra.mxu0 0.0
        %808 = vmatprep.subr.mxu0 0.0
        %809 = vmatpush1.xpose.msra.mxu0 0.0
        %810 = vmatprep.subr.mxu0 0.0
        %811 = vmatpush1.xpose.msra.mxu0 0.0
        %812 = vmatprep.subr.mxu0 0.0
        %813 = vmatpush1.xpose.msra.mxu0 0.0
        %814 = vmatprep.subr.mxu0 0.0
        %815 = vmatpush1.xpose.msra.mxu0 0.0
        %816 = vmatprep.subr.mxu0 0.0
        %817 = vmatpush1.xpose.msra.mxu0 0.0
        %818 = vmatprep.subr.mxu0 0.0
        %819 = vmatpush1.xpose.msra.mxu0 0.0
        %820 = vmatprep.subr.mxu0 0.0
        %821 = vmatpush1.xpose.msra.mxu0 %v788
        %822 = vmatprep.subr.mxu0 0.0
        %823 = vmatpush2.xpose.msra.mxu0 0.0
        %824 = vmatprep.subr.mxu0 0.0
        %825 = vmatpush2.xpose.msra.mxu0 0.0
        %826 = vmatprep.subr.mxu0 0.0
        %827 = vmatpush2.xpose.msra.mxu0 0.0
        %828 = vmatprep.subr.mxu0 0.0
        %829 = vmatpush2.xpose.msra.mxu0 0.0
        %830 = vmatprep.subr.mxu0 0.0
        %831 = vmatpush2.xpose.msra.mxu0 0.0
        %832 = vmatprep.subr.mxu0 0.0
        %833 = vmatpush2.xpose.msra.mxu0 0.0
        %834 = vmatprep.subr.mxu0 0.0
        %835 = vmatpush2.xpose.msra.mxu0 0.0
        %836 = vmatprep.subr.mxu0 0.0
        %837 = vmatpush2.xpose.msra.mxu0 0.0
        %838 = vmatprep.subr.mxu0 0.0
        %839 = vmatpush2.xpose.msra.mxu0 0.0
        %840 = vmatprep.subr.mxu0 0.0
        %841 = vmatpush2.xpose.msra.mxu0 0.0
        %842 = vmatprep.subr.mxu0 0.0
        %843 = vmatpush2.xpose.msra.mxu0 0.0
        %844 = vmatprep.subr.mxu0 0.0
        %845 = vmatpush2.xpose.msra.mxu0 0.0
        %846 = vmatprep.subr.mxu0 0.0
        %847 = vmatpush2.xpose.msra.mxu0 0.0
        %848 = vmatprep.subr.mxu0 0.0
        %849 = vmatpush2.xpose.msra.mxu0 0.0
        %850 = vmatprep.subr.mxu0 0.0
        %851 = vmatpush2.xpose.msra.mxu0 0.0
        %852 = vmatprep.subr.mxu0 0.0
        %853 = vmatpush2.xpose.msra.mxu0 0.0
        %854 = vmatprep.mubr.f32.mxu0 0.0
        %855 = vmatmul.mubr.f32.gmra.mxu0 %v786
        %v856 = vpop.f32.mrf.mxu0
        %v857 = vadd.f32 %v780, %v856
        %v858 = vpop.f32.mrf.mxu0
        %859 = vdwg.mxu0
        %v860 = vsel %vm684, -1e+30, %v857
        %v861 = vsel %vm603, %v860, -inf
        %862 = vmax.xlane.f32.xlu0 %v861
        %v863 = vpop.xlane.xlu0 %862
        %v864 = vsub.f32 %v860, %v863
        %v865 = vmul.f32 %v864, 1.442695
        %v866 = vpow.pop %v865
        %v867 = vsel %vm603, %v866, 0.0
        %868 = vadd.xlane.f32.xlu0 %v867
        %v869 = vpop.xlane.xlu0 %868
        %v870 = vrcp.pop %v869
        %v871 = vmul.f32 %v866, %v870
        %v872 = vld [vmem:[%s486] sm:$0xff]
        %v873 = vmul.f32 %v871, 0.25
        %v874 = vadd.f32 %v872, %v873
        %875 = vst.msk [vmem:[%s486] sm:$0xff] %vm603, %v874
        %876 = vrot.lane.b32.xlu0 %v778, 88
        %v877 = vpop.permute.xlu0 %876
        %v880 = vsel %vm603, %v871, 0
        %882 = vmatprep.subr.mxu0 0.0
        %883 = vmatpush1.msra.mxu0 0.0
        %884 = vmatprep.subr.mxu0 0.0
        %885 = vmatpush1.msra.mxu0 0.0
        %886 = vmatprep.subr.mxu0 0.0
        %887 = vmatpush1.msra.mxu0 0.0
        %888 = vmatprep.subr.mxu0 0.0
        %889 = vmatpush1.msra.mxu0 0.0
        %890 = vmatprep.subr.mxu0 0.0
        %891 = vmatpush1.msra.mxu0 0.0
        %892 = vmatprep.subr.mxu0 0.0
        %893 = vmatpush1.msra.mxu0 0.0
        %894 = vmatprep.subr.mxu0 0.0
        %895 = vmatpush1.msra.mxu0 0.0
        %896 = vmatprep.subr.mxu0 0.0
        %897 = vmatpush1.msra.mxu0 0.0
        %898 = vmatprep.subr.mxu0 0.0
        %899 = vmatpush1.msra.mxu0 0.0
        %900 = vmatprep.subr.mxu0 0.0
        %901 = vmatpush1.msra.mxu0 0.0
        %902 = vmatprep.subr.mxu0 0.0
        %903 = vmatpush1.msra.mxu0 0.0
        %904 = vmatprep.subr.mxu0 0.0
        %905 = vmatpush1.msra.mxu0 0.0
        %906 = vmatprep.subr.mxu0 0.0
        %907 = vmatpush1.msra.mxu0 0.0
        %908 = vmatprep.subr.mxu0 0.0
        %909 = vmatpush1.msra.mxu0 0.0
        %910 = vmatprep.subr.mxu0 0.0
        %911 = vmatpush1.msra.mxu0 0.0
        %912 = vmatprep.subr.mxu0 0.0
        %913 = vmatpush1.msra.mxu0 %v877
        %914 = vmatprep.subr.mxu0 0.0
        %915 = vmatpush2.msra.mxu0 0.0
        %916 = vmatprep.subr.mxu0 0.0
        %917 = vmatpush2.msra.mxu0 0.0
        %918 = vmatprep.subr.mxu0 0.0
        %919 = vmatpush2.msra.mxu0 0.0
        %920 = vmatprep.subr.mxu0 0.0
        %921 = vmatpush2.msra.mxu0 0.0
        %922 = vmatprep.subr.mxu0 0.0
        %923 = vmatpush2.msra.mxu0 0.0
        %924 = vmatprep.subr.mxu0 0.0
        %925 = vmatpush2.msra.mxu0 0.0
        %926 = vmatprep.subr.mxu0 0.0
        %927 = vmatpush2.msra.mxu0 0.0
        %928 = vmatprep.subr.mxu0 0.0
        %929 = vmatpush2.msra.mxu0 0.0
        %930 = vmatprep.subr.mxu0 0.0
        %931 = vmatpush2.msra.mxu0 0.0
        %932 = vmatprep.subr.mxu0 0.0
        %933 = vmatpush2.msra.mxu0 0.0
        %934 = vmatprep.subr.mxu0 0.0
        %935 = vmatpush2.msra.mxu0 0.0
        %936 = vmatprep.subr.mxu0 0.0
        %937 = vmatpush2.msra.mxu0 0.0
        %938 = vmatprep.subr.mxu0 0.0
        %939 = vmatpush2.msra.mxu0 0.0
        %940 = vmatprep.subr.mxu0 0.0
        %941 = vmatpush2.msra.mxu0 0.0
        %942 = vmatprep.subr.mxu0 0.0
        %943 = vmatpush2.msra.mxu0 0.0
        %944 = vmatprep.subr.mxu0 0.0
        %945 = vmatpush2.msra.mxu0 0.0
        %946 = vmatprep.mubr.f32.mxu0 0.0
        %947 = vmatmul.mubr.f32.gmra.mxu0 %v880
        %v948 = vpop.f32.mrf.mxu0
        %v949 = vadd.f32 0.0, %v948
        %v950 = vpop.f32.mrf.mxu0
        %951 = vdwg.mxu0
        %953 = vrot.lane.b32.xlu0 %v949, 8
        %v954 = vpop.permute.xlu0 %953
        %vm956 = vcmask 130112
        %957 = vst.msk [vmem:[#allocation3] sm:$0xff] %vm956, %v954
        %v958 = vld [vmem:[%s479] sm:$0xff]
        %v959 = vld [vmem:[#allocation3] sm:$0xff]
        %v960 = vld [vmem:[%s419] sm:$0xff]
        %v961 = vld [vmem:[%s419 + $0x8] sm:$0xff]
        %vm962 = vcmask 130048
        %v964 = vsel %vm962, %v959, 0
        %966 = vmatprep.subr.mxu0 0.0
        %967 = vmatpush1.msra.mxu0 0.0
        %968 = vmatprep.subr.mxu0 0.0
        %969 = vmatpush1.msra.mxu0 0.0
        %970 = vmatprep.subr.mxu0 0.0
        %971 = vmatpush1.msra.mxu0 0.0
        %972 = vmatprep.subr.mxu0 0.0
        %973 = vmatpush1.msra.mxu0 0.0
        %974 = vmatprep.subr.mxu0 0.0
        %975 = vmatpush1.msra.mxu0 0.0
        %976 = vmatprep.subr.mxu0 0.0
        %977 = vmatpush1.msra.mxu0 0.0
        %978 = vmatprep.subr.mxu0 0.0
        %979 = vmatpush1.msra.mxu0 0.0
        %980 = vmatprep.subr.mxu0 0.0
        %981 = vmatpush1.msra.mxu0 0.0
        %982 = vmatprep.subr.mxu0 0.0
        %983 = vmatpush1.msra.mxu0 0.0
        %984 = vmatprep.subr.mxu0 0.0
        %985 = vmatpush1.msra.mxu0 0.0
        %986 = vmatprep.subr.mxu0 0.0
        %987 = vmatpush1.msra.mxu0 0.0
        %988 = vmatprep.subr.mxu0 0.0
        %989 = vmatpush1.msra.mxu0 0.0
        %990 = vmatprep.subr.mxu0 0.0
        %991 = vmatpush1.msra.mxu0 0.0
        %992 = vmatprep.subr.mxu0 0.0
        %993 = vmatpush1.msra.mxu0 0.0
        %994 = vmatprep.subr.mxu0 0.0
        %995 = vmatpush1.msra.mxu0 %v961
        %996 = vmatprep.subr.mxu0 0.0
        %997 = vmatpush1.msra.mxu0 %v960
        %998 = vmatprep.subr.mxu0 0.0
        %999 = vmatpush2.msra.mxu0 0.0
        %1000 = vmatprep.subr.mxu0 0.0
        %1001 = vmatpush2.msra.mxu0 0.0
        %1002 = vmatprep.subr.mxu0 0.0
        %1003 = vmatpush2.msra.mxu0 0.0
        %1004 = vmatprep.subr.mxu0 0.0
        %1005 = vmatpush2.msra.mxu0 0.0
        %1006 = vmatprep.subr.mxu0 0.0
        %1007 = vmatpush2.msra.mxu0 0.0
        %1008 = vmatprep.subr.mxu0 0.0
        %1009 = vmatpush2.msra.mxu0 0.0
        %1010 = vmatprep.subr.mxu0 0.0
        %1011 = vmatpush2.msra.mxu0 0.0
        %1012 = vmatprep.subr.mxu0 0.0
        %1013 = vmatpush2.msra.mxu0 0.0
        %1014 = vmatprep.subr.mxu0 0.0
        %1015 = vmatpush2.msra.mxu0 0.0
        %1016 = vmatprep.subr.mxu0 0.0
        %1017 = vmatpush2.msra.mxu0 0.0
        %1018 = vmatprep.subr.mxu0 0.0
        %1019 = vmatpush2.msra.mxu0 0.0
        %1020 = vmatprep.subr.mxu0 0.0
        %1021 = vmatpush2.msra.mxu0 0.0
        %1022 = vmatprep.subr.mxu0 0.0
        %1023 = vmatpush2.msra.mxu0 0.0
        %1024 = vmatprep.subr.mxu0 0.0
        %1025 = vmatpush2.msra.mxu0 0.0
        %1026 = vmatprep.subr.mxu0 0.0
        %1027 = vmatpush2.msra.mxu0 0.0
        %1028 = vmatprep.subr.mxu0 0.0
        %1029 = vmatpush2.msra.mxu0 0.0
        %1030 = vmatprep.mubr.f32.mxu0 0.0
        %1031 = vmatmul.mubr.f32.gmra.mxu0 %v964
        %v1032 = vpop.f32.mrf.mxu0
        %v1033 = vadd.f32 0.0, %v1032
        %v1034 = vpop.f32.mrf.mxu0
        %1035 = vdwg.mxu0
        %v1036 = vadd.f32 %v958, %v1033
        %1037 = vst.msk [vmem:[%s479] sm:$0xff] %vm521, %v1036
        %s1038 = sand.u32 %s234, 1
        %s1039 = scalar_lea.sflag [#allocation6], %s1038
        %s1040 = sand.u32 %s234, 1
        %s1041 = smul.addr %s1040, 8
        %s1042 = scalar_lea.vmem [#allocation12], %s1041
        %s1043 = sand.u32 %s260, 1
        %s1044 = scalar_lea.sflag [#allocation14], %s1043
        %s1045 = sand.u32 %s260, 1
        %s1046 = smul.addr %s1045, 8
        %s1047 = scalar_lea.vmem [#allocation13], %s1046
        // Predicated region
        $region69: #{tpu_custom_call.1} parent=47 // pred_check
          %p1048 = pneg %p244
        $region70: #{tpu_custom_call.1} parent=47 // pred_check_branch
          %1050 = sbr.rel (%p1048) target = $region72
        $region71: #{tpu_custom_call.1} parent=47 // pred_region
          %s1052 = ssub.s32 128, 128
          %1053 = vsyncadd %s1039, %s1052
          %s1054 = smul.addr %s39, 128
          %s1055 = scalar_lea.hbm %s7, %s1054
          %s1057 = sshll.u32 %s1042, 4
          %s1058 = int_to_ptr.vmem [resolvable:$true] %s1057
          %1060 = dma.vmem_to_hbm [thread:$0]  %s1058, 128, %s1055, %s1039
        $region72: #{tpu_custom_call.1} parent=47 // pred_fallthru
          _
        // Predicated region
        $region73: #{tpu_custom_call.1} parent=47 // pred_check
          %p1061 = pneg %p270
        $region74: #{tpu_custom_call.1} parent=47 // pred_check_branch
          %1063 = sbr.rel (%p1061) target = $region76
        $region75: #{tpu_custom_call.1} parent=47 // pred_region
          %s1065 = ssub.s32 128, 128
          %1066 = vsyncadd %s1044, %s1065
          %s1067 = smul.addr %s39, 128
          %s1068 = scalar_lea.hbm %s8, %s1067
          %s1070 = sshll.u32 %s1047, 4
          %s1071 = int_to_ptr.vmem [resolvable:$true] %s1070
          %1073 = dma.vmem_to_hbm [thread:$0]  %s1071, 128, %s1068, %s1044
        $region76: #{tpu_custom_call.1} parent=47 // pred_fallthru
          _
      $region48: #{tpu_custom_call.1} parent=5 // pred_fallthru
        _
      %p1074 = scmp.le.s32.totalorder 2, %s30
      // Predicated region
      $region77: #{tpu_custom_call.1} parent=5 // pred_check
        %p1075 = pneg %p1074
      $region78: #{tpu_custom_call.1} parent=5 // pred_check_branch
        %1077 = sbr.rel (%p1075) target = $region80
      $region79: #{tpu_custom_call.1} parent=5 // pred_region
        %s1078 = ssub.s32 %s30, 2
        // Predicated region
        $region81: #{tpu_custom_call.1} parent=79 // pred_check
          %p1079 = pneg %p250
        $region82: #{tpu_custom_call.1} parent=79 // pred_check_branch
          %1081 = sbr.rel (%p1079) target = $region84
        $region83: #{tpu_custom_call.1} parent=79 // pred_region
          %s1082 = sand.u32 %s235, 1
          %s1083 = scalar_lea.sflag [#allocation6], %s1082
          %s1084 = sand.u32 %s235, 1
          %s1085 = smul.addr %s1084, 8
          %s1086 = scalar_lea.vmem [#allocation12], %s1085
          %1087 = dma.done %s1083, 128
        $region84: #{tpu_custom_call.1} parent=79 // pred_fallthru
          _
        // Predicated region
        $region85: #{tpu_custom_call.1} parent=79 // pred_check
          %p1088 = pneg %p276
        $region86: #{tpu_custom_call.1} parent=79 // pred_check_branch
          %1090 = sbr.rel (%p1088) target = $region88
        $region87: #{tpu_custom_call.1} parent=79 // pred_region
          %s1091 = sand.u32 %s261, 1
          %s1092 = scalar_lea.sflag [#allocation14], %s1091
          %s1093 = sand.u32 %s261, 1
          %s1094 = smul.addr %s1093, 8
          %s1095 = scalar_lea.vmem [#allocation13], %s1094
          %1096 = dma.done %s1092, 128
        $region88: #{tpu_custom_call.1} parent=79 // pred_fallthru
          _
      $region80: #{tpu_custom_call.1} parent=5 // pred_fallthru
        _
    $region6: #{tpu_custom_call.1} parent=1 // loop_footer
      %s34 = sadd.s32 1, %s30
    $region7: #{tpu_custom_call.1} parent=1 // loop_footer_branch
      %29 = sbr.rel target = $region3
    $region8: #{tpu_custom_call.1} parent=1 // loop_exit
      _
    %1097 = vsyncpa [#allocation5], 1
    %s1098 = scalar_lea.sflag [#allocation5], 1
    %1099 = vsyncpa %s1098, 1
    %1100 = vsyncpa [#allocation8], 1
    %s1101 = scalar_lea.sflag [#allocation8], 1
    %1102 = vsyncpa %s1101, 1
    %1103 = vsyncpa [#allocation11], 1
    %s1104 = scalar_lea.sflag [#allocation11], 1
    %1105 = vsyncpa %s1104, 1
    %1106 = vsyncpa [#allocation6], 1
    %s1107 = scalar_lea.sflag [#allocation6], 1
    %1108 = vsyncpa %s1107, 1
    %1109 = vsyncpa [#allocation14], 1
    %s1110 = scalar_lea.sflag [#allocation14], 1
    %1111 = vsyncpa %s1110, 1

</llo_original>
